<compile_context>
chip_gen: v7x
topology: tpu7x:2x2x1
jax: 0.10.0
libtpu: 0.0.40
codegen_flags: <defaults>
</compile_context>

<pallas_src>
import functools

import numpy as np
import jax
import jax.numpy as jnp
from jax.experimental import pallas as pl
from jax.experimental.pallas import tpu as pltpu

LANES = 128


# ---------------------------------------------------------------------------
# Host-side preprocessing (done once per parameter set).
# ---------------------------------------------------------------------------
def _build_banded_weights(w, b, w_in, cin, cin_pad, stride, pad, cout_pad):
    """Lane-concatenated banded weight matrix (128, K*128) + packed bias row."""
    wn = np.asarray(w, np.float32)               # (cout, cin, K, K)  (OIHW)
    cout, cin_w, K, _ = wn.shape
    assert cin_w == cin
    ow = (w_in + 2 * pad - K) // stride + 1
    # Specialized to lane-exact packing; see structural-zero caveat above.
    assert w_in * cin_pad == LANES and ow * cout_pad == LANES

    B = np.zeros((K, w_in * cin_pad, ow * cout_pad), np.float32)
    for kh in range(K):
        for o in range(ow):
            for kw in range(K):
                wc = stride * o + kw - pad       # input column for this tap
                if 0 <= wc < w_in:
                    B[kh,
                      wc * cin_pad: wc * cin_pad + cin,
                      o * cout_pad: o * cout_pad + cout] = wn[:, :, kh, kw].T
    b_wide = np.concatenate(list(B), axis=1)     # (128, K*128)

    bias_row = np.zeros((ow * cout_pad,), np.float32)
    if b is not None:
        bn = np.asarray(b, np.float32)
        for o in range(ow):
            bias_row[o * cout_pad: o * cout_pad + cout] = bn
    return b_wide, bias_row


def _build_select_mats(h_in, oh, K, stride, pad, nb):
    """0/1 row-selection matrices, block-diagonal over the NB stacked images."""
    S = np.zeros((K, nb * oh, nb * h_in), np.float32)
    for kh in range(K):
        for n in range(nb):
            for ro in range(oh):
                ri = stride * ro + kh - pad
                if 0 <= ri < h_in:
                    S[kh, n * oh + ro, n * h_in + ri] = 1.0
    return S


def prepare_discriminator(params, w_final, image_size, in_channels, images_per_step):
    """Precompute bf16 banded weights, bias table, row-select matrices, specs."""
    nb = int(images_per_step)
    h_in = w_in = image_size
    cin = in_channels
    cin_pad = LANES // w_in
    assert cin <= cin_pad and w_in * cin_pad == LANES

    layer_defs = [(w, b, 2, 1, True) for (w, b) in params]   # 4x4, s2, p1, LReLU
    layer_defs.append((w_final, None, 1, 1, False))          # 3x3, s1, p1, no act

    b_blocks, bias_rows, s_mats, specs = [], [], [], []
    for (w, b, stride, pad, leaky) in layer_defs:
        K = w.shape[2]
        oh = (h_in + 2 * pad - K) // stride + 1
        ow = (w_in + 2 * pad - K) // stride + 1
        cout = w.shape[0]
        cout_pad = LANES // ow
        assert cout <= cout_pad
        bw, brow = _build_banded_weights(w, b, w_in, cin, cin_pad,
                                         stride, pad, cout_pad)
        b_blocks.append(bw)
        bias_rows.append(brow)
        s_mats.append(jnp.asarray(_build_select_mats(h_in, oh, K, stride, pad, nb)))
        specs.append((h_in, oh, K, leaky))
        h_in, w_in, cin, cin_pad = oh, ow, cout, cout_pad

    b_wide = jnp.asarray(np.concatenate(b_blocks, axis=1), dtype=jnp.bfloat16)
    bias_all = jnp.asarray(np.stack(bias_rows, axis=0), dtype=jnp.float32)
    out_info = (oh, ow, cout_pad, cout)
    return (b_wide, bias_all, tuple(s_mats), tuple(specs), out_info,
            LANES // image_size, nb)


# ---------------------------------------------------------------------------
# The fused Pallas kernel: whole forward for NB stacked images, all in VMEM.
# ---------------------------------------------------------------------------
def _disc_kernel(x_ref, b_ref, bias_ref, *rest, specs, nb):
    s_refs, o_ref = rest[:-1], rest[-1]
    act = x_ref[...]                                   # (NB*H0, 128) f32
    col = 0
    for li, (h_in, oh, K, leaky) in enumerate(specs):
        # ONE lane-concatenated weight matmul per layer (bf16 operands,
        # f32 accumulation on the MXU).
        w = b_ref[:, col * LANES:(col + K) * LANES]    # (128, K*128) bf16
        taps = jnp.dot(act.astype(jnp.bfloat16), w,
                       preferred_element_type=jnp.float32)   # (NB*h_in, K*128)
        col += K
        # Combine the K row taps with tiny 0/1 selection matmuls -> one full
        # (NB*oh, 128) tile.  No per-row adds, no masked single-row stores.
        out = jnp.dot(s_refs[li][0], taps[:, :LANES],
                      preferred_element_type=jnp.float32)
        for kh in range(1, K):
            out = out + jnp.dot(s_refs[li][kh],
                                taps[:, kh * LANES:(kh + 1) * LANES],
                                preferred_element_type=jnp.float32)
        out = out + bias_ref[li:li + 1, :]             # zero row for final layer
        if leaky:
            out = jnp.where(out >= 0.0, out, 0.01 * out)
        act = out                                      # carried as a value
    oh_f = specs[-1][1]
    for i in range(nb):                                # final (tiny) output tile
        o_ref[i] = act[i * oh_f:(i + 1) * oh_f, :]


# ---------------------------------------------------------------------------
# Wrapper: single boundary relayout + one pallas_call.
# ---------------------------------------------------------------------------
def discriminator_forward(x, prepared):
    b_wide, bias_all, s_mats, specs, out_info, cin_pad0, nb = prepared
    N, C, H, W = x.shape
    oh_f, ow_f, coutp_f, cout_f = out_info
    assert W * cin_pad0 == LANES and C <= cin_pad0

    n_blocks = pl.cdiv(N, nb)
    n_pad = n_blocks * nb

    # NCHW -> NHWC -> zero-pad channels & batch -> row-packed (N_pad*H, 128).
    # This relayout happens exactly once at the module boundary.
    xt = jnp.transpose(x, (0, 2, 3, 1))
    xt = jnp.pad(xt, ((0, n_pad - N), (0, 0), (0, 0), (0, cin_pad0 - C)))
    x_packed = xt.reshape(n_pad * H, W * cin_pad0).astype(jnp.float32)

    kernel = functools.partial(_disc_kernel, specs=specs, nb=nb)
    in_specs = [
        pl.BlockSpec((nb * H, LANES), lambda n: (n, 0)),     # NB stacked images
        pl.BlockSpec(b_wide.shape, lambda n: (0, 0)),        # grid-invariant
        pl.BlockSpec(bias_all.shape, lambda n: (0, 0)),      # grid-invariant
    ] + [pl.BlockSpec(s.shape, lambda n: (0, 0, 0)) for s in s_mats]

    out_packed = pl.pallas_call(
        kernel,
        out_shape=jax.ShapeDtypeStruct((n_pad, oh_f, LANES), jnp.float32),
        grid=(n_blocks,),
        in_specs=in_specs,
        out_specs=pl.BlockSpec((nb, oh_f, LANES), lambda n: (n, 0, 0)),
        compiler_params=pltpu.CompilerParams(dimension_semantics=("parallel",)),
    )(x_packed, b_wide, bias_all, *s_mats)

    out = out_packed[:N].reshape(N, oh_f, ow_f, coutp_f)[..., :cout_f]
    return jnp.transpose(out, (0, 3, 1, 2))                  # (N, 1, oh, ow)


# ---------------------------------------------------------------------------
# Parameter init (matches the PyTorch module structure) + pure-JAX reference
# ---------------------------------------------------------------------------
def init_discriminator_params(key, conv_dim=8, repeat_num=3, in_channels=3):
    params = []
    cin, cout = in_channels, conv_dim
    for _ in range(repeat_num):
        key, wk, bk = jax.random.split(key, 3)
        w = jax.random.normal(wk, (cout, cin, 4, 4), jnp.float32) * 0.05
        b = jax.random.normal(bk, (cout,), jnp.float32) * 0.05
        params.append((w, b))
        cin, cout = cout, cout * 2
    key, wk = jax.random.split(key)
    w_final = jax.random.normal(wk, (1, cin, 3, 3), jnp.float32) * 0.05  # bias=False
    return params, w_final


def _ref_conv(x, w, b, stride, pad):
    out = jax.lax.conv_general_dilated(
        x, w, window_strides=(stride, stride),
        padding=((pad, pad), (pad, pad)),
        dimension_numbers=("NCHW", "OIHW", "NCHW"))
    if b is not None:
        out = out + b.reshape(1, -1, 1, 1)
    return out


def _ref_forward(x, params, w_final):
    h = x
    for (w, b) in params:
        h = _ref_conv(h, w, b, 2, 1)
        h = jnp.where(h >= 0.0, h, 0.01 * h)       # LeakyReLU(0.01), as in the spec
    return _ref_conv(h, w_final, None, 1, 1)


if __name__ == "__main__":
    key = jax.random.PRNGKey(0)
    k_x, k_p = jax.random.split(key)

    # Small config consistent with the module: image_size=16, conv_dim=8,
    # repeat_num=3  ->  spatial 16 -> 8 -> 4 -> 2, output (N, 1, 2, 2).
    # N=4 with images_per_step=2: doubles the matmul M dim per grid step while
    # keeping grid=(2,) so both v7x TensorCores get a block.
    N = 4
    x = jax.random.normal(k_x, (N, 3, 16, 16), jnp.float32)
    params, w_final = init_discriminator_params(k_p, conv_dim=8, repeat_num=3)
    prepared = prepare_discriminator(params, w_final, image_size=16,
                                     in_channels=3, images_per_step=2)

    out_src = jax.block_until_ready(discriminator_forward(x, prepared))
    ref = jax.block_until_ready(_ref_forward(x, params, w_final))

    assert out_src.shape == (N, 1, 2, 2), out_src.shape
    max_err = float(jnp.max(jnp.abs(out_src - ref)))
    # bf16 weights / matmul operands (f32 accumulation) -> loosened tolerance.
    assert jnp.allclose(out_src, ref, atol=1e-2, rtol=1e-2), max_err
    print("KERNEL_OK")
</pallas_src>

<mosaic_0001>
module attributes {stable_mosaic.version = 11 : i64} {
  func.func @_disc_kernel(%arg0: i32, %arg1: memref<32x128xf32, #tpu.memory_space<vmem>>, %arg2: memref<128x1920xbf16, #tpu.memory_space<vmem>>, %arg3: memref<4x128xf32, #tpu.memory_space<vmem>>, %arg4: memref<4x16x32xf32, #tpu.memory_space<vmem>>, %arg5: memref<4x8x16xf32, #tpu.memory_space<vmem>>, %arg6: memref<4x4x8xf32, #tpu.memory_space<vmem>>, %arg7: memref<3x4x4xf32, #tpu.memory_space<vmem>>, %arg8: memref<2x2x128xf32, #tpu.memory_space<vmem>>) attributes {dimension_semantics = [#tpu.dimension_semantics<parallel>], iteration_bounds = array<i64: 2>, scalar_prefetch = 0 : i64, scratch_operands = 0 : i64, tpu.core_type = #tpu.core_type<tc>, window_params = [{transform_indices = @transform_0, window_bounds = array<i64: 32, 128>}, {pipeline_mode = #tpu.pipeline_mode<synchronous>, transform_indices = @transform_1, window_bounds = array<i64: 128, 1920>}, {pipeline_mode = #tpu.pipeline_mode<synchronous>, transform_indices = @transform_2, window_bounds = array<i64: 4, 128>}, {pipeline_mode = #tpu.pipeline_mode<synchronous>, transform_indices = @transform_3, window_bounds = array<i64: 4, 16, 32>}, {pipeline_mode = #tpu.pipeline_mode<synchronous>, transform_indices = @transform_4, window_bounds = array<i64: 4, 8, 16>}, {pipeline_mode = #tpu.pipeline_mode<synchronous>, transform_indices = @transform_5, window_bounds = array<i64: 4, 4, 8>}, {pipeline_mode = #tpu.pipeline_mode<synchronous>, transform_indices = @transform_6, window_bounds = array<i64: 3, 4, 4>}, {transform_indices = @transform_7, window_bounds = array<i64: 2, 2, 128>}]} {
    %c0 = arith.constant 0 : index
    %c0_0 = arith.constant 0 : index
    %0 = vector.load %arg1[%c0, %c0_0] : memref<32x128xf32, #tpu.memory_space<vmem>>, vector<32x128xf32>
    %c0_1 = arith.constant 0 : index
    %c0_2 = arith.constant 0 : index
    %1 = vector.load %arg2[%c0_1, %c0_2] : memref<128x1920xbf16, #tpu.memory_space<vmem>>, vector<128x512xbf16>
    %2 = arith.truncf %0 : vector<32x128xf32> to vector<32x128xbf16>
    %cst = arith.constant dense<0.000000e+00> : vector<32x512xf32>
    %3 = tpu.matmul %2, %1, %cst {dimension_numbers = #tpu.dot_dimension_numbers<[1], [0], [0], [1], [0, 0, 1, 1], [], []>} : vector<32x128xbf16>, vector<128x512xbf16>, vector<32x512xf32> -> vector<32x512xf32>
    %c0_3 = arith.constant 0 : index
    %c0_4 = arith.constant 0 : index
    %c0_5 = arith.constant 0 : index
    %4 = vector.load %arg4[%c0_3, %c0_4, %c0_5] : memref<4x16x32xf32, #tpu.memory_space<vmem>>, vector<1x16x32xf32>
    %5 = vector.shape_cast %4 : vector<1x16x32xf32> to vector<16x32xf32>
    %6 = vector.extract_strided_slice %3 {offsets = [0, 0], sizes = [32, 128], strides = [1, 1]} : vector<32x512xf32> to vector<32x128xf32>
    %cst_6 = arith.constant dense<0.000000e+00> : vector<16x128xf32>
    %7 = tpu.matmul %5, %6, %cst_6 {dimension_numbers = #tpu.dot_dimension_numbers<[1], [0], [0], [1], [0, 0, 1, 1], [], []>} : vector<16x32xf32>, vector<32x128xf32>, vector<16x128xf32> -> vector<16x128xf32>
    %c1 = arith.constant 1 : index
    %c0_7 = arith.constant 0 : index
    %c0_8 = arith.constant 0 : index
    %8 = vector.load %arg4[%c1, %c0_7, %c0_8] : memref<4x16x32xf32, #tpu.memory_space<vmem>>, vector<1x16x32xf32>
    %9 = vector.shape_cast %8 : vector<1x16x32xf32> to vector<16x32xf32>
    %10 = vector.extract_strided_slice %3 {offsets = [0, 128], sizes = [32, 128], strides = [1, 1]} : vector<32x512xf32> to vector<32x128xf32>
    %cst_9 = arith.constant dense<0.000000e+00> : vector<16x128xf32>
    %11 = tpu.matmul %9, %10, %cst_9 {dimension_numbers = #tpu.dot_dimension_numbers<[1], [0], [0], [1], [0, 0, 1, 1], [], []>} : vector<16x32xf32>, vector<32x128xf32>, vector<16x128xf32> -> vector<16x128xf32>
    %12 = arith.addf %7, %11 : vector<16x128xf32>
    %c2 = arith.constant 2 : index
    %c0_10 = arith.constant 0 : index
    %c0_11 = arith.constant 0 : index
    %13 = vector.load %arg4[%c2, %c0_10, %c0_11] : memref<4x16x32xf32, #tpu.memory_space<vmem>>, vector<1x16x32xf32>
    %14 = vector.shape_cast %13 : vector<1x16x32xf32> to vector<16x32xf32>
    %15 = vector.extract_strided_slice %3 {offsets = [0, 256], sizes = [32, 128], strides = [1, 1]} : vector<32x512xf32> to vector<32x128xf32>
    %cst_12 = arith.constant dense<0.000000e+00> : vector<16x128xf32>
    %16 = tpu.matmul %14, %15, %cst_12 {dimension_numbers = #tpu.dot_dimension_numbers<[1], [0], [0], [1], [0, 0, 1, 1], [], []>} : vector<16x32xf32>, vector<32x128xf32>, vector<16x128xf32> -> vector<16x128xf32>
    %17 = arith.addf %12, %16 : vector<16x128xf32>
    %c3 = arith.constant 3 : index
    %c0_13 = arith.constant 0 : index
    %c0_14 = arith.constant 0 : index
    %18 = vector.load %arg4[%c3, %c0_13, %c0_14] : memref<4x16x32xf32, #tpu.memory_space<vmem>>, vector<1x16x32xf32>
    %19 = vector.shape_cast %18 : vector<1x16x32xf32> to vector<16x32xf32>
    %20 = vector.extract_strided_slice %3 {offsets = [0, 384], sizes = [32, 128], strides = [1, 1]} : vector<32x512xf32> to vector<32x128xf32>
    %cst_15 = arith.constant dense<0.000000e+00> : vector<16x128xf32>
    %21 = tpu.matmul %19, %20, %cst_15 {dimension_numbers = #tpu.dot_dimension_numbers<[1], [0], [0], [1], [0, 0, 1, 1], [], []>} : vector<16x32xf32>, vector<32x128xf32>, vector<16x128xf32> -> vector<16x128xf32>
    %22 = arith.addf %17, %21 : vector<16x128xf32>
    %c0_16 = arith.constant 0 : index
    %c0_17 = arith.constant 0 : index
    %23 = vector.load %arg3[%c0_16, %c0_17] : memref<4x128xf32, #tpu.memory_space<vmem>>, vector<1x128xf32>
    %24 = vector.broadcast %23 : vector<1x128xf32> to vector<16x128xf32>
    %25 = arith.addf %22, %24 : vector<16x128xf32>
    %cst_18 = arith.constant 0.000000e+00 : f32
    %26 = vector.broadcast %cst_18 : f32 to vector<16x128xf32>
    %27 = arith.cmpf oge, %25, %26 : vector<16x128xf32>
    %cst_19 = arith.constant 0.00999999977 : f32
    %28 = vector.broadcast %cst_19 : f32 to vector<16x128xf32>
    %29 = arith.mulf %28, %25 : vector<16x128xf32>
    %30 = arith.select %27, %25, %29 : vector<16x128xi1>, vector<16x128xf32>
    %c0_20 = arith.constant 0 : index
    %c512 = arith.constant 512 : index
    %31 = vector.load %arg2[%c0_20, %c512] : memref<128x1920xbf16, #tpu.memory_space<vmem>>, vector<128x512xbf16>
    %32 = arith.truncf %30 : vector<16x128xf32> to vector<16x128xbf16>
    %cst_21 = arith.constant dense<0.000000e+00> : vector<16x512xf32>
    %33 = tpu.matmul %32, %31, %cst_21 {dimension_numbers = #tpu.dot_dimension_numbers<[1], [0], [0], [1], [0, 0, 1, 1], [], []>} : vector<16x128xbf16>, vector<128x512xbf16>, vector<16x512xf32> -> vector<16x512xf32>
    %c0_22 = arith.constant 0 : index
    %c0_23 = arith.constant 0 : index
    %c0_24 = arith.constant 0 : index
    %34 = vector.load %arg5[%c0_22, %c0_23, %c0_24] : memref<4x8x16xf32, #tpu.memory_space<vmem>>, vector<1x8x16xf32>
    %35 = vector.shape_cast %34 : vector<1x8x16xf32> to vector<8x16xf32>
    %36 = vector.extract_strided_slice %33 {offsets = [0, 0], sizes = [16, 128], strides = [1, 1]} : vector<16x512xf32> to vector<16x128xf32>
    %cst_25 = arith.constant dense<0.000000e+00> : vector<8x128xf32>
    %37 = tpu.matmul %35, %36, %cst_25 {dimension_numbers = #tpu.dot_dimension_numbers<[1], [0], [0], [1], [0, 0, 1, 1], [], []>} : vector<8x16xf32>, vector<16x128xf32>, vector<8x128xf32> -> vector<8x128xf32>
    %c1_26 = arith.constant 1 : index
    %c0_27 = arith.constant 0 : index
    %c0_28 = arith.constant 0 : index
    %38 = vector.load %arg5[%c1_26, %c0_27, %c0_28] : memref<4x8x16xf32, #tpu.memory_space<vmem>>, vector<1x8x16xf32>
    %39 = vector.shape_cast %38 : vector<1x8x16xf32> to vector<8x16xf32>
    %40 = vector.extract_strided_slice %33 {offsets = [0, 128], sizes = [16, 128], strides = [1, 1]} : vector<16x512xf32> to vector<16x128xf32>
    %cst_29 = arith.constant dense<0.000000e+00> : vector<8x128xf32>
    %41 = tpu.matmul %39, %40, %cst_29 {dimension_numbers = #tpu.dot_dimension_numbers<[1], [0], [0], [1], [0, 0, 1, 1], [], []>} : vector<8x16xf32>, vector<16x128xf32>, vector<8x128xf32> -> vector<8x128xf32>
    %42 = arith.addf %37, %41 : vector<8x128xf32>
    %c2_30 = arith.constant 2 : index
    %c0_31 = arith.constant 0 : index
    %c0_32 = arith.constant 0 : index
    %43 = vector.load %arg5[%c2_30, %c0_31, %c0_32] : memref<4x8x16xf32, #tpu.memory_space<vmem>>, vector<1x8x16xf32>
    %44 = vector.shape_cast %43 : vector<1x8x16xf32> to vector<8x16xf32>
    %45 = vector.extract_strided_slice %33 {offsets = [0, 256], sizes = [16, 128], strides = [1, 1]} : vector<16x512xf32> to vector<16x128xf32>
    %cst_33 = arith.constant dense<0.000000e+00> : vector<8x128xf32>
    %46 = tpu.matmul %44, %45, %cst_33 {dimension_numbers = #tpu.dot_dimension_numbers<[1], [0], [0], [1], [0, 0, 1, 1], [], []>} : vector<8x16xf32>, vector<16x128xf32>, vector<8x128xf32> -> vector<8x128xf32>
    %47 = arith.addf %42, %46 : vector<8x128xf32>
    %c3_34 = arith.constant 3 : index
    %c0_35 = arith.constant 0 : index
    %c0_36 = arith.constant 0 : index
    %48 = vector.load %arg5[%c3_34, %c0_35, %c0_36] : memref<4x8x16xf32, #tpu.memory_space<vmem>>, vector<1x8x16xf32>
    %49 = vector.shape_cast %48 : vector<1x8x16xf32> to vector<8x16xf32>
    %50 = vector.extract_strided_slice %33 {offsets = [0, 384], sizes = [16, 128], strides = [1, 1]} : vector<16x512xf32> to vector<16x128xf32>
    %cst_37 = arith.constant dense<0.000000e+00> : vector<8x128xf32>
    %51 = tpu.matmul %49, %50, %cst_37 {dimension_numbers = #tpu.dot_dimension_numbers<[1], [0], [0], [1], [0, 0, 1, 1], [], []>} : vector<8x16xf32>, vector<16x128xf32>, vector<8x128xf32> -> vector<8x128xf32>
    %52 = arith.addf %47, %51 : vector<8x128xf32>
    %c1_38 = arith.constant 1 : index
    %c0_39 = arith.constant 0 : index
    %53 = vector.load %arg3[%c1_38, %c0_39] : memref<4x128xf32, #tpu.memory_space<vmem>>, vector<1x128xf32>
    %54 = vector.broadcast %53 : vector<1x128xf32> to vector<8x128xf32>
    %55 = arith.addf %52, %54 : vector<8x128xf32>
    %cst_40 = arith.constant 0.000000e+00 : f32
    %56 = vector.broadcast %cst_40 : f32 to vector<8x128xf32>
    %57 = arith.cmpf oge, %55, %56 : vector<8x128xf32>
    %cst_41 = arith.constant 0.00999999977 : f32
    %58 = vector.broadcast %cst_41 : f32 to vector<8x128xf32>
    %59 = arith.mulf %58, %55 : vector<8x128xf32>
    %60 = arith.select %57, %55, %59 : vector<8x128xi1>, vector<8x128xf32>
    %c0_42 = arith.constant 0 : index
    %c1024 = arith.constant 1024 : index
    %61 = vector.load %arg2[%c0_42, %c1024] : memref<128x1920xbf16, #tpu.memory_space<vmem>>, vector<128x512xbf16>
    %62 = arith.truncf %60 : vector<8x128xf32> to vector<8x128xbf16>
    %cst_43 = arith.constant dense<0.000000e+00> : vector<8x512xf32>
    %63 = tpu.matmul %62, %61, %cst_43 {dimension_numbers = #tpu.dot_dimension_numbers<[1], [0], [0], [1], [0, 0, 1, 1], [], []>} : vector<8x128xbf16>, vector<128x512xbf16>, vector<8x512xf32> -> vector<8x512xf32>
    %c0_44 = arith.constant 0 : index
    %c0_45 = arith.constant 0 : index
    %c0_46 = arith.constant 0 : index
    %64 = vector.load %arg6[%c0_44, %c0_45, %c0_46] : memref<4x4x8xf32, #tpu.memory_space<vmem>>, vector<1x4x8xf32>
    %65 = vector.shape_cast %64 : vector<1x4x8xf32> to vector<4x8xf32>
    %66 = vector.extract_strided_slice %63 {offsets = [0, 0], sizes = [8, 128], strides = [1, 1]} : vector<8x512xf32> to vector<8x128xf32>
    %cst_47 = arith.constant dense<0.000000e+00> : vector<4x128xf32>
    %67 = tpu.matmul %65, %66, %cst_47 {dimension_numbers = #tpu.dot_dimension_numbers<[1], [0], [0], [1], [0, 0, 1, 1], [], []>} : vector<4x8xf32>, vector<8x128xf32>, vector<4x128xf32> -> vector<4x128xf32>
    %c1_48 = arith.constant 1 : index
    %c0_49 = arith.constant 0 : index
    %c0_50 = arith.constant 0 : index
    %68 = vector.load %arg6[%c1_48, %c0_49, %c0_50] : memref<4x4x8xf32, #tpu.memory_space<vmem>>, vector<1x4x8xf32>
    %69 = vector.shape_cast %68 : vector<1x4x8xf32> to vector<4x8xf32>
    %70 = vector.extract_strided_slice %63 {offsets = [0, 128], sizes = [8, 128], strides = [1, 1]} : vector<8x512xf32> to vector<8x128xf32>
    %cst_51 = arith.constant dense<0.000000e+00> : vector<4x128xf32>
    %71 = tpu.matmul %69, %70, %cst_51 {dimension_numbers = #tpu.dot_dimension_numbers<[1], [0], [0], [1], [0, 0, 1, 1], [], []>} : vector<4x8xf32>, vector<8x128xf32>, vector<4x128xf32> -> vector<4x128xf32>
    %72 = arith.addf %67, %71 : vector<4x128xf32>
    %c2_52 = arith.constant 2 : index
    %c0_53 = arith.constant 0 : index
    %c0_54 = arith.constant 0 : index
    %73 = vector.load %arg6[%c2_52, %c0_53, %c0_54] : memref<4x4x8xf32, #tpu.memory_space<vmem>>, vector<1x4x8xf32>
    %74 = vector.shape_cast %73 : vector<1x4x8xf32> to vector<4x8xf32>
    %75 = vector.extract_strided_slice %63 {offsets = [0, 256], sizes = [8, 128], strides = [1, 1]} : vector<8x512xf32> to vector<8x128xf32>
    %cst_55 = arith.constant dense<0.000000e+00> : vector<4x128xf32>
    %76 = tpu.matmul %74, %75, %cst_55 {dimension_numbers = #tpu.dot_dimension_numbers<[1], [0], [0], [1], [0, 0, 1, 1], [], []>} : vector<4x8xf32>, vector<8x128xf32>, vector<4x128xf32> -> vector<4x128xf32>
    %77 = arith.addf %72, %76 : vector<4x128xf32>
    %c3_56 = arith.constant 3 : index
    %c0_57 = arith.constant 0 : index
    %c0_58 = arith.constant 0 : index
    %78 = vector.load %arg6[%c3_56, %c0_57, %c0_58] : memref<4x4x8xf32, #tpu.memory_space<vmem>>, vector<1x4x8xf32>
    %79 = vector.shape_cast %78 : vector<1x4x8xf32> to vector<4x8xf32>
    %80 = vector.extract_strided_slice %63 {offsets = [0, 384], sizes = [8, 128], strides = [1, 1]} : vector<8x512xf32> to vector<8x128xf32>
    %cst_59 = arith.constant dense<0.000000e+00> : vector<4x128xf32>
    %81 = tpu.matmul %79, %80, %cst_59 {dimension_numbers = #tpu.dot_dimension_numbers<[1], [0], [0], [1], [0, 0, 1, 1], [], []>} : vector<4x8xf32>, vector<8x128xf32>, vector<4x128xf32> -> vector<4x128xf32>
    %82 = arith.addf %77, %81 : vector<4x128xf32>
    %c2_60 = arith.constant 2 : index
    %c0_61 = arith.constant 0 : index
    %83 = vector.load %arg3[%c2_60, %c0_61] : memref<4x128xf32, #tpu.memory_space<vmem>>, vector<1x128xf32>
    %84 = vector.broadcast %83 : vector<1x128xf32> to vector<4x128xf32>
    %85 = arith.addf %82, %84 : vector<4x128xf32>
    %cst_62 = arith.constant 0.000000e+00 : f32
    %86 = vector.broadcast %cst_62 : f32 to vector<4x128xf32>
    %87 = arith.cmpf oge, %85, %86 : vector<4x128xf32>
    %cst_63 = arith.constant 0.00999999977 : f32
    %88 = vector.broadcast %cst_63 : f32 to vector<4x128xf32>
    %89 = arith.mulf %88, %85 : vector<4x128xf32>
    %90 = arith.select %87, %85, %89 : vector<4x128xi1>, vector<4x128xf32>
    %c0_64 = arith.constant 0 : index
    %c1536 = arith.constant 1536 : index
    %91 = vector.load %arg2[%c0_64, %c1536] : memref<128x1920xbf16, #tpu.memory_space<vmem>>, vector<128x384xbf16>
    %92 = arith.truncf %90 : vector<4x128xf32> to vector<4x128xbf16>
    %cst_65 = arith.constant dense<0.000000e+00> : vector<4x384xf32>
    %93 = tpu.matmul %92, %91, %cst_65 {dimension_numbers = #tpu.dot_dimension_numbers<[1], [0], [0], [1], [0, 0, 1, 1], [], []>} : vector<4x128xbf16>, vector<128x384xbf16>, vector<4x384xf32> -> vector<4x384xf32>
    %c0_66 = arith.constant 0 : index
    %c0_67 = arith.constant 0 : index
    %c0_68 = arith.constant 0 : index
    %94 = vector.load %arg7[%c0_66, %c0_67, %c0_68] : memref<3x4x4xf32, #tpu.memory_space<vmem>>, vector<1x4x4xf32>
    %95 = vector.shape_cast %94 : vector<1x4x4xf32> to vector<4x4xf32>
    %96 = vector.extract_strided_slice %93 {offsets = [0, 0], sizes = [4, 128], strides = [1, 1]} : vector<4x384xf32> to vector<4x128xf32>
    %cst_69 = arith.constant dense<0.000000e+00> : vector<4x128xf32>
    %97 = tpu.matmul %95, %96, %cst_69 {dimension_numbers = #tpu.dot_dimension_numbers<[1], [0], [0], [1], [0, 0, 1, 1], [], []>} : vector<4x4xf32>, vector<4x128xf32>, vector<4x128xf32> -> vector<4x128xf32>
    %c1_70 = arith.constant 1 : index
    %c0_71 = arith.constant 0 : index
    %c0_72 = arith.constant 0 : index
    %98 = vector.load %arg7[%c1_70, %c0_71, %c0_72] : memref<3x4x4xf32, #tpu.memory_space<vmem>>, vector<1x4x4xf32>
    %99 = vector.shape_cast %98 : vector<1x4x4xf32> to vector<4x4xf32>
    %100 = vector.extract_strided_slice %93 {offsets = [0, 128], sizes = [4, 128], strides = [1, 1]} : vector<4x384xf32> to vector<4x128xf32>
    %cst_73 = arith.constant dense<0.000000e+00> : vector<4x128xf32>
    %101 = tpu.matmul %99, %100, %cst_73 {dimension_numbers = #tpu.dot_dimension_numbers<[1], [0], [0], [1], [0, 0, 1, 1], [], []>} : vector<4x4xf32>, vector<4x128xf32>, vector<4x128xf32> -> vector<4x128xf32>
    %102 = arith.addf %97, %101 : vector<4x128xf32>
    %c2_74 = arith.constant 2 : index
    %c0_75 = arith.constant 0 : index
    %c0_76 = arith.constant 0 : index
    %103 = vector.load %arg7[%c2_74, %c0_75, %c0_76] : memref<3x4x4xf32, #tpu.memory_space<vmem>>, vector<1x4x4xf32>
    %104 = vector.shape_cast %103 : vector<1x4x4xf32> to vector<4x4xf32>
    %105 = vector.extract_strided_slice %93 {offsets = [0, 256], sizes = [4, 128], strides = [1, 1]} : vector<4x384xf32> to vector<4x128xf32>
    %cst_77 = arith.constant dense<0.000000e+00> : vector<4x128xf32>
    %106 = tpu.matmul %104, %105, %cst_77 {dimension_numbers = #tpu.dot_dimension_numbers<[1], [0], [0], [1], [0, 0, 1, 1], [], []>} : vector<4x4xf32>, vector<4x128xf32>, vector<4x128xf32> -> vector<4x128xf32>
    %107 = arith.addf %102, %106 : vector<4x128xf32>
    %c3_78 = arith.constant 3 : index
    %c0_79 = arith.constant 0 : index
    %108 = vector.load %arg3[%c3_78, %c0_79] : memref<4x128xf32, #tpu.memory_space<vmem>>, vector<1x128xf32>
    %109 = vector.broadcast %108 : vector<1x128xf32> to vector<4x128xf32>
    %110 = arith.addf %107, %109 : vector<4x128xf32>
    %111 = vector.extract_strided_slice %110 {offsets = [0, 0], sizes = [2, 128], strides = [1, 1]} : vector<4x128xf32> to vector<2x128xf32>
    %c0_80 = arith.constant 0 : index
    %c0_81 = arith.constant 0 : index
    %c0_82 = arith.constant 0 : index
    %112 = vector.load %arg8[%c0_80, %c0_81, %c0_82] : memref<2x2x128xf32, #tpu.memory_space<vmem>>, vector<1x2x128xf32>
    %113 = vector.shape_cast %112 : vector<1x2x128xf32> to vector<2x128xf32>
    %114 = vector.shape_cast %111 : vector<2x128xf32> to vector<1x2x128xf32>
    tpu.vector_store %arg8[%c0_80, %c0_81, %c0_82], %114 {strides = array<i32>} : memref<2x2x128xf32, #tpu.memory_space<vmem>>, vector<1x2x128xf32>,
    %115 = vector.extract_strided_slice %110 {offsets = [2, 0], sizes = [2, 128], strides = [1, 1]} : vector<4x128xf32> to vector<2x128xf32>
    %c1_83 = arith.constant 1 : index
    %c0_84 = arith.constant 0 : index
    %c0_85 = arith.constant 0 : index
    %116 = vector.load %arg8[%c1_83, %c0_84, %c0_85] : memref<2x2x128xf32, #tpu.memory_space<vmem>>, vector<1x2x128xf32>
    %117 = vector.shape_cast %116 : vector<1x2x128xf32> to vector<2x128xf32>
    %118 = vector.shape_cast %115 : vector<2x128xf32> to vector<1x2x128xf32>
    tpu.vector_store %arg8[%c1_83, %c0_84, %c0_85], %118 {strides = array<i32>} : memref<2x2x128xf32, #tpu.memory_space<vmem>>, vector<1x2x128xf32>,
    return
  }
  func.func @transform_0(%arg0: i32) -> (i32, i32) {
    %c0_i32 = arith.constant 0 : i32
    %c0_i32_0 = arith.constant 0 : i32
    return %arg0, %c0_i32 : i32, i32
  }
  func.func @transform_1(%arg0: i32) -> (i32, i32) {
    %c0_i32 = arith.constant 0 : i32
    %c0_i32_0 = arith.constant 0 : i32
    %c0_i32_1 = arith.constant 0 : i32
    return %c0_i32, %c0_i32_0 : i32, i32
  }
  func.func @transform_2(%arg0: i32) -> (i32, i32) {
    %c0_i32 = arith.constant 0 : i32
    %c0_i32_0 = arith.constant 0 : i32
    %c0_i32_1 = arith.constant 0 : i32
    return %c0_i32, %c0_i32_0 : i32, i32
  }
  func.func @transform_3(%arg0: i32) -> (i32, i32, i32) {
    %c0_i32 = arith.constant 0 : i32
    %c0_i32_0 = arith.constant 0 : i32
    %c0_i32_1 = arith.constant 0 : i32
    %c0_i32_2 = arith.constant 0 : i32
    return %c0_i32, %c0_i32_0, %c0_i32_1 : i32, i32, i32
  }
  func.func @transform_4(%arg0: i32) -> (i32, i32, i32) {
    %c0_i32 = arith.constant 0 : i32
    %c0_i32_0 = arith.constant 0 : i32
    %c0_i32_1 = arith.constant 0 : i32
    %c0_i32_2 = arith.constant 0 : i32
    return %c0_i32, %c0_i32_0, %c0_i32_1 : i32, i32, i32
  }
  func.func @transform_5(%arg0: i32) -> (i32, i32, i32) {
    %c0_i32 = arith.constant 0 : i32
    %c0_i32_0 = arith.constant 0 : i32
    %c0_i32_1 = arith.constant 0 : i32
    %c0_i32_2 = arith.constant 0 : i32
    return %c0_i32, %c0_i32_0, %c0_i32_1 : i32, i32, i32
  }
  func.func @transform_6(%arg0: i32) -> (i32, i32, i32) {
    %c0_i32 = arith.constant 0 : i32
    %c0_i32_0 = arith.constant 0 : i32
    %c0_i32_1 = arith.constant 0 : i32
    %c0_i32_2 = arith.constant 0 : i32
    return %c0_i32, %c0_i32_0, %c0_i32_1 : i32, i32, i32
  }
  func.func @transform_7(%arg0: i32) -> (i32, i32, i32) {
    %c0_i32 = arith.constant 0 : i32
    %c0_i32_0 = arith.constant 0 : i32
    %c0_i32_1 = arith.constant 0 : i32
    return %arg0, %c0_i32, %c0_i32_0 : i32, i32, i32
  }
}

</mosaic_0001>

<llo_original>
// kernel: tpu_custom_call.1
$region0: #{tpu_custom_call.1}
  #allocation0 [shape = 'u32[]', space=smem, size = 0x4, offset = 0x4, fixed_abs, tag = 'smem constant byte address 0x4 - core index']
  #allocation1 [shape = 'u32[144,128]{1,0:T(1,128)}', space=vmem, size = 0x12000, scoped, tag = 'internal scratch']
  %s0 = inlined_call_operand.hbm [shape: f32[64,128], index: 0, kind: input, shape index: {}]
  %s1 = inlined_call_operand.hbm [shape: bf16[128,1920], index: 1, kind: input, shape index: {}]
  %s2 = inlined_call_operand.hbm [shape: f32[4,128], index: 2, kind: input, shape index: {}]
  %s3 = inlined_call_operand.hbm [shape: f32[4,16,32], index: 3, kind: input, shape index: {}]
  %s4 = inlined_call_operand.hbm [shape: f32[4,8,16], index: 4, kind: input, shape index: {}]
  %s5 = inlined_call_operand.vmem [shape: f32[4,4,8], index: 5, kind: input, shape index: {}]
  %s6 = inlined_call_operand.hbm [shape: f32[3,4,4], index: 6, kind: input, shape index: {}]
  %s7 = inlined_call_operand.hbm [shape: f32[4,2,128], index: 7, kind: output, shape index: {}]
  %s8 = sld [smem:[#allocation0]]
  $region85: #{tpu_custom_call.1} parent=0
    _
  %s10 = ssub.s32 1, %s8
  %s11 = scalar_select 0, %s10, %s8
  $region1: #{tpu_custom_call.1} parent=0
    #allocation2 [shape = 'u8[32768]{0}', space=vmem, size = 0x8000, scoped, tag = 'input window, operand 0']
    #allocation3 [shape = 's32[2]{0}', space=sflag, size = 0x8, scoped, tag = 'scoped memory for tpu_custom_call.1']
    #allocation4 [shape = 's32[2]{0}', space=sflag, size = 0x8, scoped, tag = 'scoped memory for tpu_custom_call.1']
    #allocation5 [shape = 'u8[491520]{0}', space=vmem, size = 0x78000, scoped, tag = 'input window, operand 1, single buffered']
    #allocation6 [shape = 's32[1]{0}', space=sflag, size = 0x4, scoped, tag = 'scoped memory for tpu_custom_call.1']
    #allocation7 [shape = 'u8[2048]{0}', space=vmem, size = 0x800, scoped, tag = 'input window, operand 2, single buffered']
    #allocation8 [shape = 'u8[32768]{0}', space=vmem, size = 0x8000, scoped, tag = 'input window, operand 3, single buffered']
    #allocation9 [shape = 's32[1]{0}', space=sflag, size = 0x4, scoped, tag = 'scoped memory for tpu_custom_call.1']
    #allocation10 [shape = 'u8[16384]{0}', space=vmem, size = 0x4000, scoped, tag = 'input window, operand 4, single buffered']
    #allocation11 [shape = 'u8[6144]{0}', space=vmem, size = 0x1800, scoped, tag = 'input window, operand 6, single buffered']
    #allocation12 [shape = 's32[1]{0}', space=sflag, size = 0x4, scoped, tag = 'scoped memory for tpu_custom_call.1']
    #allocation13 [shape = 'u8[4096]{0}', space=vmem, size = 0x1000, scoped, tag = 'output window, operand 0']
    %12 = vsyncpa [#allocation3], 0
    %s13 = scalar_lea.sflag [#allocation3], 1
    %14 = vsyncpa %s13, 0
    %15 = vsyncpa [#allocation6], 0
    %16 = vsyncpa [#allocation9], 0
    %17 = vsyncpa [#allocation12], 0
    %18 = vsyncpa [#allocation4], 0
    %s19 = scalar_lea.sflag [#allocation4], 1
    %20 = vsyncpa %s19, 0
    loop: start=0, step=1, limit=4
    $region2: #{tpu_custom_call.1} parent=1 // loop_pre_header
      _
    $region3: #{tpu_custom_call.1} parent=1 // loop_header
      %s22 = sphi 0, %s26
      %p23 = scmp.ge.s32.totalorder %s22, 4
      %s32 = sphi 0, %s34
      %s35 = sphi 0, %s32
      %s36 = sphi 0, %s35
      %s52 = sphi 0, %s36
      %s56 = sphi 0, %s56
      %s58 = sphi 0, %s56
      %s59 = sphi 0, %s58
      %s73 = sphi 0, %s59
      %s77 = sphi 0, %s77
      %s79 = sphi 0, %s77
      %s80 = sphi 0, %s79
      %s94 = sphi 0, %s80
      %s98 = sphi 0, %s98
      %s100 = sphi 0, %s98
      %s101 = sphi 0, %s100
      %s115 = sphi 0, %s101
      %s119 = sphi 0, %s119
      %s121 = sphi 0, %s119
      %s122 = sphi 0, %s121
      %s136 = sphi 0, %s122
      %s140 = sphi 0, %s140
      %s142 = sphi 0, %s140
      %s143 = sphi 0, %s142
      %s157 = sphi 0, %s143
      %s161 = sphi 0, %s161
      %s163 = sphi 0, %s161
      %s164 = sphi 0, %s163
      %s178 = sphi 0, %s164
      %s184 = sphi 0, %s186
      %s187 = sphi 0, %s184
      %s188 = sphi 0, %s187
      %s204 = sphi 0, %s188
    $region4: #{tpu_custom_call.1} parent=1 // loop_header_branch
      %25 = sbr.rel (%p23) target = $region8
    $region5: #{tpu_custom_call.1} parent=1 // loop_body
      %s27 = ssub.s32 %s22, 1
      %s28 = ssub.s32 %s22, 2
      %s29 = sadd.s32 %s22, 1
      %s30 = ssub.s32 %s22, %s29
      %p31 = scmp.eq.s32.totalorder %s30, 0
      %s33 = sadd.s32 %s32, 1
      %s34 = scalar_select %p31, %s32, %s33
      %p37 = pneg %p31
      %p38 = scmp.eq.s32.totalorder %s22, 1
      %p39 = por %p37, %p38
      %p40 = scmp.ne.s32.totalorder %s32, %s35
      %p41 = scmp.eq.s32.totalorder %s22, 0
      %p42 = por %p40, %p41
      %p43 = scmp.ne.s32.totalorder %s32, %s35
      %p44 = scmp.eq.s32.totalorder %s27, 1
      %p45 = por %p43, %p44
      %p46 = scmp.ne.s32.totalorder %s35, %s36
      %p47 = scmp.eq.s32.totalorder %s27, 0
      %p48 = por %p46, %p47
      %p49 = scmp.ne.s32.totalorder %s35, %s36
      %p50 = scmp.eq.s32.totalorder %s28, 1
      %p51 = por %p49, %p50
      %p53 = scmp.ne.s32.totalorder %s36, %s52
      %p54 = scmp.eq.s32.totalorder %s28, 0
      %p55 = por %p53, %p54
      %s57 = sadd.s32 %s56, 1
      %p60 = scmp.eq.s32.totalorder %s22, 1
      %p61 = scmp.ne.s32.totalorder %s56, %s58
      %p62 = scmp.eq.s32.totalorder %s22, 0
      %p63 = por %p61, %p62
      %p64 = scmp.ne.s32.totalorder %s56, %s58
      %p65 = scmp.eq.s32.totalorder %s27, 1
      %p66 = por %p64, %p65
      %p67 = scmp.ne.s32.totalorder %s58, %s59
      %p68 = scmp.eq.s32.totalorder %s27, 0
      %p69 = por %p67, %p68
      %p70 = scmp.ne.s32.totalorder %s58, %s59
      %p71 = scmp.eq.s32.totalorder %s28, 1
      %p72 = por %p70, %p71
      %p74 = scmp.ne.s32.totalorder %s59, %s73
      %p75 = scmp.eq.s32.totalorder %s28, 0
      %p76 = por %p74, %p75
      %s78 = sadd.s32 %s77, 1
      %p81 = scmp.eq.s32.totalorder %s22, 1
      %p82 = scmp.ne.s32.totalorder %s77, %s79
      %p83 = scmp.eq.s32.totalorder %s22, 0
      %p84 = por %p82, %p83
      %p85 = scmp.ne.s32.totalorder %s77, %s79
      %p86 = scmp.eq.s32.totalorder %s27, 1
      %p87 = por %p85, %p86
      %p88 = scmp.ne.s32.totalorder %s79, %s80
      %p89 = scmp.eq.s32.totalorder %s27, 0
      %p90 = por %p88, %p89
      %p91 = scmp.ne.s32.totalorder %s79, %s80
      %p92 = scmp.eq.s32.totalorder %s28, 1
      %p93 = por %p91, %p92
      %p95 = scmp.ne.s32.totalorder %s80, %s94
      %p96 = scmp.eq.s32.totalorder %s28, 0
      %p97 = por %p95, %p96
      %s99 = sadd.s32 %s98, 1
      %p102 = scmp.eq.s32.totalorder %s22, 1
      %p103 = scmp.ne.s32.totalorder %s98, %s100
      %p104 = scmp.eq.s32.totalorder %s22, 0
      %p105 = por %p103, %p104
      %p106 = scmp.ne.s32.totalorder %s98, %s100
      %p107 = scmp.eq.s32.totalorder %s27, 1
      %p108 = por %p106, %p107
      %p109 = scmp.ne.s32.totalorder %s100, %s101
      %p110 = scmp.eq.s32.totalorder %s27, 0
      %p111 = por %p109, %p110
      %p112 = scmp.ne.s32.totalorder %s100, %s101
      %p113 = scmp.eq.s32.totalorder %s28, 1
      %p114 = por %p112, %p113
      %p116 = scmp.ne.s32.totalorder %s101, %s115
      %p117 = scmp.eq.s32.totalorder %s28, 0
      %p118 = por %p116, %p117
      %s120 = sadd.s32 %s119, 1
      %p123 = scmp.eq.s32.totalorder %s22, 1
      %p124 = scmp.ne.s32.totalorder %s119, %s121
      %p125 = scmp.eq.s32.totalorder %s22, 0
      %p126 = por %p124, %p125
      %p127 = scmp.ne.s32.totalorder %s119, %s121
      %p128 = scmp.eq.s32.totalorder %s27, 1
      %p129 = por %p127, %p128
      %p130 = scmp.ne.s32.totalorder %s121, %s122
      %p131 = scmp.eq.s32.totalorder %s27, 0
      %p132 = por %p130, %p131
      %p133 = scmp.ne.s32.totalorder %s121, %s122
      %p134 = scmp.eq.s32.totalorder %s28, 1
      %p135 = por %p133, %p134
      %p137 = scmp.ne.s32.totalorder %s122, %s136
      %p138 = scmp.eq.s32.totalorder %s28, 0
      %p139 = por %p137, %p138
      %s141 = sadd.s32 %s140, 1
      %p144 = scmp.eq.s32.totalorder %s22, 1
      %p145 = scmp.ne.s32.totalorder %s140, %s142
      %p146 = scmp.eq.s32.totalorder %s22, 0
      %p147 = por %p145, %p146
      %p148 = scmp.ne.s32.totalorder %s140, %s142
      %p149 = scmp.eq.s32.totalorder %s27, 1
      %p150 = por %p148, %p149
      %p151 = scmp.ne.s32.totalorder %s142, %s143
      %p152 = scmp.eq.s32.totalorder %s27, 0
      %p153 = por %p151, %p152
      %p154 = scmp.ne.s32.totalorder %s142, %s143
      %p155 = scmp.eq.s32.totalorder %s28, 1
      %p156 = por %p154, %p155
      %p158 = scmp.ne.s32.totalorder %s143, %s157
      %p159 = scmp.eq.s32.totalorder %s28, 0
      %p160 = por %p158, %p159
      %s162 = sadd.s32 %s161, 1
      %p165 = scmp.eq.s32.totalorder %s22, 1
      %p166 = scmp.ne.s32.totalorder %s161, %s163
      %p167 = scmp.eq.s32.totalorder %s22, 0
      %p168 = por %p166, %p167
      %p169 = scmp.ne.s32.totalorder %s161, %s163
      %p170 = scmp.eq.s32.totalorder %s27, 1
      %p171 = por %p169, %p170
      %p172 = scmp.ne.s32.totalorder %s163, %s164
      %p173 = scmp.eq.s32.totalorder %s27, 0
      %p174 = por %p172, %p173
      %p175 = scmp.ne.s32.totalorder %s163, %s164
      %p176 = scmp.eq.s32.totalorder %s28, 1
      %p177 = por %p175, %p176
      %p179 = scmp.ne.s32.totalorder %s164, %s178
      %p180 = scmp.eq.s32.totalorder %s28, 0
      %p181 = por %p179, %p180
      %s182 = ssub.s32 %s22, %s29
      %p183 = scmp.eq.s32.totalorder %s182, 0
      %s185 = sadd.s32 %s184, 1
      %s186 = scalar_select %p183, %s184, %s185
      %p189 = pneg %p183
      %p190 = scmp.eq.s32.totalorder %s22, 1
      %p191 = por %p189, %p190
      %p192 = scmp.ne.s32.totalorder %s184, %s187
      %p193 = scmp.eq.s32.totalorder %s22, 0
      %p194 = por %p192, %p193
      %p195 = scmp.ne.s32.totalorder %s184, %s187
      %p196 = scmp.eq.s32.totalorder %s27, 1
      %p197 = por %p195, %p196
      %p198 = scmp.ne.s32.totalorder %s187, %s188
      %p199 = scmp.eq.s32.totalorder %s27, 0
      %p200 = por %p198, %p199
      %p201 = scmp.ne.s32.totalorder %s187, %s188
      %p202 = scmp.eq.s32.totalorder %s28, 1
      %p203 = por %p201, %p202
      %p205 = scmp.ne.s32.totalorder %s188, %s204
      %p206 = scmp.eq.s32.totalorder %s28, 0
      %p207 = por %p205, %p206
      %p208 = scmp.le.s32.totalorder 1, %s22
      %p209 = scmp.lt.s32.totalorder %s22, 3
      %p210 = pnand %p208, %p209
      %p211 = pneg %p210
      // Predicated region
      $region9: #{tpu_custom_call.1} parent=5 // pred_check
        _
      $region10: #{tpu_custom_call.1} parent=5 // pred_check_branch
        %213 = sbr.rel (%p210) target = $region12
      $region11: #{tpu_custom_call.1} parent=5 // pred_region
        %s214 = ssub.s32 %s22, 1
        // Predicated region
        $region13: #{tpu_custom_call.1} parent=11 // pred_check
          %p215 = pneg %p69
        $region14: #{tpu_custom_call.1} parent=11 // pred_check_branch
          %217 = sbr.rel (%p215) target = $region16
        $region15: #{tpu_custom_call.1} parent=11 // pred_region
          %s219 = ssub.s32 15360, 15360
          %220 = vsyncadd [#allocation6], %s219
          %s221 = sshll.u32 [#allocation5], 4
          %s222 = int_to_ptr.vmem [resolvable:$true] %s221
          %227 = dma.hbm_to_vmem [thread:$0]  %s1, 15360, %s222, [#allocation6], 960, 960, 60
        $region16: #{tpu_custom_call.1} parent=11 // pred_fallthru
          _
        // Predicated region
        $region17: #{tpu_custom_call.1} parent=11 // pred_check
          %p228 = pneg %p90
        $region18: #{tpu_custom_call.1} parent=11 // pred_check_branch
          %230 = sbr.rel (%p228) target = $region20
        $region19: #{tpu_custom_call.1} parent=11 // pred_region
          %s232 = ssub.s32 64, 64
          %233 = vsyncadd [#allocation6], %s232
          %s235 = sshll.u32 [#allocation7], 4
          %s236 = int_to_ptr.vmem [resolvable:$true] %s235
          %238 = dma.hbm_to_vmem [thread:$0]  %s2, 64, %s236, [#allocation6]
        $region20: #{tpu_custom_call.1} parent=11 // pred_fallthru
          _
        // Predicated region
        $region21: #{tpu_custom_call.1} parent=11 // pred_check
          %p239 = pneg %p111
        $region22: #{tpu_custom_call.1} parent=11 // pred_check_branch
          %241 = sbr.rel (%p239) target = $region24
        $region23: #{tpu_custom_call.1} parent=11 // pred_region
          %s243 = ssub.s32 1024, 1024
          %244 = vsyncadd [#allocation9], %s243
          %s245 = sshll.u32 [#allocation8], 4
          %s246 = int_to_ptr.vmem [resolvable:$true] %s245
          %251 = dma.hbm_to_vmem [thread:$0]  %s3, 1024, %s246, [#allocation9], 128, 128, 8
        $region24: #{tpu_custom_call.1} parent=11 // pred_fallthru
          _
        // Predicated region
        $region25: #{tpu_custom_call.1} parent=11 // pred_check
          %p252 = pneg %p132
        $region26: #{tpu_custom_call.1} parent=11 // pred_check_branch
          %254 = sbr.rel (%p252) target = $region28
        $region27: #{tpu_custom_call.1} parent=11 // pred_region
          %s256 = ssub.s32 512, 512
          %257 = vsyncadd [#allocation9], %s256
          %s258 = sshll.u32 [#allocation10], 4
          %s259 = int_to_ptr.vmem [resolvable:$true] %s258
          %264 = dma.hbm_to_vmem [thread:$0]  %s4, 512, %s259, [#allocation9], 128, 128, 8
        $region28: #{tpu_custom_call.1} parent=11 // pred_fallthru
          _
        // Predicated region
        $region29: #{tpu_custom_call.1} parent=11 // pred_check
          %p265 = pneg %p153
        $region30: #{tpu_custom_call.1} parent=11 // pred_check_branch
          %267 = sbr.rel (%p265) target = $region32
        $region31: #{tpu_custom_call.1} parent=11 // pred_region
          _
        $region32: #{tpu_custom_call.1} parent=11 // pred_fallthru
          _
        // Predicated region
        $region33: #{tpu_custom_call.1} parent=11 // pred_check
          %p268 = pneg %p174
        $region34: #{tpu_custom_call.1} parent=11 // pred_check_branch
          %270 = sbr.rel (%p268) target = $region36
        $region35: #{tpu_custom_call.1} parent=11 // pred_region
          %s272 = ssub.s32 192, 192
          %273 = vsyncadd [#allocation12], %s272
          %s274 = sshll.u32 [#allocation11], 4
          %s275 = int_to_ptr.vmem [resolvable:$true] %s274
          %280 = dma.hbm_to_vmem [thread:$0]  %s6, 192, %s275, [#allocation12], 64, 64, 4
        $region36: #{tpu_custom_call.1} parent=11 // pred_fallthru
          _
      $region12: #{tpu_custom_call.1} parent=5 // pred_fallthru
        _
      %p281 = scmp.lt.s32.totalorder %s22, 2
      // Predicated region
      $region37: #{tpu_custom_call.1} parent=5 // pred_check
        %p282 = pneg %p281
      $region38: #{tpu_custom_call.1} parent=5 // pred_check_branch
        %284 = sbr.rel (%p282) target = $region40
      $region39: #{tpu_custom_call.1} parent=5 // pred_region
        // Predicated region
        $region41: #{tpu_custom_call.1} parent=39 // pred_check
          %p285 = pneg %p42
        $region42: #{tpu_custom_call.1} parent=39 // pred_check_branch
          %287 = sbr.rel (%p285) target = $region44
        $region43: #{tpu_custom_call.1} parent=39 // pred_region
          %s288 = sand.u32 %s32, 1
          %s289 = scalar_lea.sflag [#allocation3], %s288
          %s290 = sand.u32 %s32, 1
          %s291 = smul.addr %s290, 32
          %s292 = scalar_lea.vmem [#allocation2], %s291
          %s293 = smul.u32 4, %s22
          %s295 = ssub.s32 512, 512
          %296 = vsyncadd %s289, %s295
          %s297 = smul.addr %s293, 128
          %s298 = scalar_lea.hbm %s0, %s297
          %s299 = sshll.u32 %s292, 4
          %s300 = int_to_ptr.vmem [resolvable:$true] %s299
          %305 = dma.hbm_to_vmem [thread:$0]  %s298, 512, %s300, %s289, 128, 128, 8
        $region44: #{tpu_custom_call.1} parent=39 // pred_fallthru
          _
      $region40: #{tpu_custom_call.1} parent=5 // pred_fallthru
        _
      %p306 = scmp.le.s32.totalorder 1, %s22
      %p307 = scmp.lt.s32.totalorder %s22, 3
      %p308 = pnand %p306, %p307
      %p309 = pneg %p308
      // Predicated region
      $region45: #{tpu_custom_call.1} parent=5 // pred_check
        _
      $region46: #{tpu_custom_call.1} parent=5 // pred_check_branch
        %311 = sbr.rel (%p308) target = $region48
      $region47: #{tpu_custom_call.1} parent=5 // pred_region
        %s312 = ssub.s32 %s22, 1
        %s313 = sand.u32 %s35, 1
        %s314 = scalar_lea.sflag [#allocation3], %s313
        %s315 = sand.u32 %s35, 1
        %s316 = smul.addr %s315, 32
        %s317 = scalar_lea.vmem [#allocation2], %s316
        // Predicated region
        $region49: #{tpu_custom_call.1} parent=47 // pred_check
          %p318 = pneg %p48
        $region50: #{tpu_custom_call.1} parent=47 // pred_check_branch
          %320 = sbr.rel (%p318) target = $region52
        $region51: #{tpu_custom_call.1} parent=47 // pred_region
          %321 = dma.done %s314, 512
        $region52: #{tpu_custom_call.1} parent=47 // pred_fallthru
          _
        // Predicated region
        $region53: #{tpu_custom_call.1} parent=47 // pred_check
          %p322 = pneg %p69
        $region54: #{tpu_custom_call.1} parent=47 // pred_check_branch
          %324 = sbr.rel (%p322) target = $region56
        $region55: #{tpu_custom_call.1} parent=47 // pred_region
          %325 = dma.done [#allocation6], 15360
        $region56: #{tpu_custom_call.1} parent=47 // pred_fallthru
          _
        // Predicated region
        $region57: #{tpu_custom_call.1} parent=47 // pred_check
          %p326 = pneg %p90
        $region58: #{tpu_custom_call.1} parent=47 // pred_check_branch
          %328 = sbr.rel (%p326) target = $region60
        $region59: #{tpu_custom_call.1} parent=47 // pred_region
          %329 = dma.done [#allocation6], 64
        $region60: #{tpu_custom_call.1} parent=47 // pred_fallthru
          _
        // Predicated region
        $region61: #{tpu_custom_call.1} parent=47 // pred_check
          %p330 = pneg %p111
        $region62: #{tpu_custom_call.1} parent=47 // pred_check_branch
          %332 = sbr.rel (%p330) target = $region64
        $region63: #{tpu_custom_call.1} parent=47 // pred_region
          %333 = dma.done [#allocation9], 1024
        $region64: #{tpu_custom_call.1} parent=47 // pred_fallthru
          _
        // Predicated region
        $region65: #{tpu_custom_call.1} parent=47 // pred_check
          %p334 = pneg %p132
        $region66: #{tpu_custom_call.1} parent=47 // pred_check_branch
          %336 = sbr.rel (%p334) target = $region68
        $region67: #{tpu_custom_call.1} parent=47 // pred_region
          %337 = dma.done [#allocation9], 512
        $region68: #{tpu_custom_call.1} parent=47 // pred_fallthru
          _
        // Predicated region
        $region69: #{tpu_custom_call.1} parent=47 // pred_check
          %p338 = pneg %p174
        $region70: #{tpu_custom_call.1} parent=47 // pred_check_branch
          %340 = sbr.rel (%p338) target = $region72
        $region71: #{tpu_custom_call.1} parent=47 // pred_region
          %341 = dma.done [#allocation12], 192
        $region72: #{tpu_custom_call.1} parent=47 // pred_fallthru
          _
        %s342 = sand.u32 %s35, 1
        %s343 = scalar_lea.sflag [#allocation3], %s342
        %s344 = sand.u32 %s35, 1
        %s345 = smul.addr %s344, 32
        %s346 = scalar_lea.vmem [#allocation2], %s345
        %p347 = pneg %p48
        %p348 = pneg %p45
        %p349 = pneg %p69
        %p350 = pneg %p66
        %p351 = pneg %p90
        %p352 = pneg %p87
        %p353 = pneg %p111
        %p354 = pneg %p108
        %p355 = pneg %p132
        %p356 = pneg %p129
        %p357 = pneg %p153
        %p358 = pneg %p150
        %p359 = pneg %p174
        %p360 = pneg %p171
        %p361 = pneg %p200
        %p362 = pneg %p197
        %s363 = sand.u32 %s187, 1
        %s364 = scalar_lea.sflag [#allocation4], %s363
        %s365 = sand.u32 %s187, 1
        %s366 = smul.addr %s365, 4
        %s367 = scalar_lea.vmem [#allocation13], %s366
        %s368 = smul.u32 4, %s27
        %s369 = smul.u32 2, %s27
        %v371 = vld [vmem:[%s317] sm:$0xff]
        %v372 = vld [vmem:[%s317 + $0x8] sm:$0xff]
        %v373 = vld [vmem:[%s317 + $0x10] sm:$0xff]
        %v374 = vld [vmem:[%s317 + $0x18] sm:$0xff]
        %v375 = vld [vmem:[#allocation5] sm:$0xff]
        %v376 = vld [vmem:[#allocation5 + $0x8] sm:$0xff]
        %v377 = vld [vmem:[#allocation5 + $0x3c] sm:$0xff]
        %v378 = vld [vmem:[#allocation5 + $0x44] sm:$0xff]
        %v379 = vld [vmem:[#allocation5 + $0x78] sm:$0xff]
        %v380 = vld [vmem:[#allocation5 + $0x80] sm:$0xff]
        %v381 = vld [vmem:[#allocation5 + $0xb4] sm:$0xff]
        %v382 = vld [vmem:[#allocation5 + $0xbc] sm:$0xff]
        %v383 = vld [vmem:[#allocation5 + $0xf0] sm:$0xff]
        %v384 = vld [vmem:[#allocation5 + $0xf8] sm:$0xff]
        %v385 = vld [vmem:[#allocation5 + $0x12c] sm:$0xff]
        %v386 = vld [vmem:[#allocation5 + $0x134] sm:$0xff]
        %v387 = vld [vmem:[#allocation5 + $0x168] sm:$0xff]
        %v388 = vld [vmem:[#allocation5 + $0x170] sm:$0xff]
        %v389 = vld [vmem:[#allocation5 + $0x1a4] sm:$0xff]
        %v390 = vld [vmem:[#allocation5 + $0x1ac] sm:$0xff]
        %v391 = vld [vmem:[#allocation5 + $0x1e0] sm:$0xff]
        %v392 = vld [vmem:[#allocation5 + $0x1e8] sm:$0xff]
        %v393 = vld [vmem:[#allocation5 + $0x21c] sm:$0xff]
        %v394 = vld [vmem:[#allocation5 + $0x224] sm:$0xff]
        %v395 = vld [vmem:[#allocation5 + $0x258] sm:$0xff]
        %v396 = vld [vmem:[#allocation5 + $0x260] sm:$0xff]
        %v397 = vld [vmem:[#allocation5 + $0x294] sm:$0xff]
        %v398 = vld [vmem:[#allocation5 + $0x29c] sm:$0xff]
        %v399 = vld [vmem:[#allocation5 + $0x2d0] sm:$0xff]
        %v400 = vld [vmem:[#allocation5 + $0x2d8] sm:$0xff]
        %v401 = vld [vmem:[#allocation5 + $0x30c] sm:$0xff]
        %v402 = vld [vmem:[#allocation5 + $0x314] sm:$0xff]
        %v403 = vld [vmem:[#allocation5 + $0x348] sm:$0xff]
        %v404 = vld [vmem:[#allocation5 + $0x350] sm:$0xff]
        %v405 = vld [vmem:[#allocation5 + $0x384] sm:$0xff]
        %v406 = vld [vmem:[#allocation5 + $0x38c] sm:$0xff]
        %v407 = vpack.c.bf16 %v372, %v371
        %v408 = vpack.c.bf16 %v374, %v373
        %v441 = vunpack.c.l.b16 %v375
        %v442 = vunpack.c.h.b16 %v375
        %v443 = vunpack.c.l.b16 %v376
        %v444 = vunpack.c.h.b16 %v376
        %v445 = vunpack.c.l.b16 %v377
        %v446 = vunpack.c.h.b16 %v377
        %v447 = vunpack.c.l.b16 %v378
        %v448 = vunpack.c.h.b16 %v378
        %v449 = vunpack.c.l.b16 %v379
        %v450 = vunpack.c.h.b16 %v379
        %v451 = vunpack.c.l.b16 %v380
        %v452 = vunpack.c.h.b16 %v380
        %v453 = vunpack.c.l.b16 %v381
        %v454 = vunpack.c.h.b16 %v381
        %v455 = vunpack.c.l.b16 %v382
        %v456 = vunpack.c.h.b16 %v382
        %v457 = vunpack.c.l.b16 %v383
        %v458 = vunpack.c.h.b16 %v383
        %v459 = vunpack.c.l.b16 %v384
        %v460 = vunpack.c.h.b16 %v384
        %v461 = vunpack.c.l.b16 %v385
        %v462 = vunpack.c.h.b16 %v385
        %v463 = vunpack.c.l.b16 %v386
        %v464 = vunpack.c.h.b16 %v386
        %v465 = vunpack.c.l.b16 %v387
        %v466 = vunpack.c.h.b16 %v387
        %v467 = vunpack.c.l.b16 %v388
        %v468 = vunpack.c.h.b16 %v388
        %v469 = vunpack.c.l.b16 %v389
        %v470 = vunpack.c.h.b16 %v389
        %v471 = vunpack.c.l.b16 %v390
        %v472 = vunpack.c.h.b16 %v390
        %v473 = vunpack.c.l.b16 %v391
        %v474 = vunpack.c.h.b16 %v391
        %v475 = vunpack.c.l.b16 %v392
        %v476 = vunpack.c.h.b16 %v392
        %v477 = vunpack.c.l.b16 %v393
        %v478 = vunpack.c.h.b16 %v393
        %v479 = vunpack.c.l.b16 %v394
        %v480 = vunpack.c.h.b16 %v394
        %v481 = vunpack.c.l.b16 %v395
        %v482 = vunpack.c.h.b16 %v395
        %v483 = vunpack.c.l.b16 %v396
        %v484 = vunpack.c.h.b16 %v396
        %v485 = vunpack.c.l.b16 %v397
        %v486 = vunpack.c.h.b16 %v397
        %v487 = vunpack.c.l.b16 %v398
        %v488 = vunpack.c.h.b16 %v398
        %v489 = vunpack.c.l.b16 %v399
        %v490 = vunpack.c.h.b16 %v399
        %v491 = vunpack.c.l.b16 %v400
        %v492 = vunpack.c.h.b16 %v400
        %v493 = vunpack.c.l.b16 %v401
        %v494 = vunpack.c.h.b16 %v401
        %v495 = vunpack.c.l.b16 %v402
        %v496 = vunpack.c.h.b16 %v402
        %v497 = vunpack.c.l.b16 %v403
        %v498 = vunpack.c.h.b16 %v403
        %v499 = vunpack.c.l.b16 %v404
        %v500 = vunpack.c.h.b16 %v404
        %v501 = vunpack.c.l.b16 %v405
        %v502 = vunpack.c.h.b16 %v405
        %v503 = vunpack.c.l.b16 %v406
        %v504 = vunpack.c.h.b16 %v406
        %v505 = vpack.c.b16 %v445, %v441
        %v506 = vpack.c.b16 %v446, %v442
        %v507 = vpack.c.b16 %v447, %v443
        %v508 = vpack.c.b16 %v448, %v444
        %v509 = vpack.c.b16 %v453, %v449
        %v510 = vpack.c.b16 %v454, %v450
        %v511 = vpack.c.b16 %v455, %v451
        %v512 = vpack.c.b16 %v456, %v452
        %v513 = vpack.c.b16 %v461, %v457
        %v514 = vpack.c.b16 %v462, %v458
        %v515 = vpack.c.b16 %v463, %v459
        %v516 = vpack.c.b16 %v464, %v460
        %v517 = vpack.c.b16 %v469, %v465
        %v518 = vpack.c.b16 %v470, %v466
        %v519 = vpack.c.b16 %v471, %v467
        %v520 = vpack.c.b16 %v472, %v468
        %v521 = vpack.c.b16 %v477, %v473
        %v522 = vpack.c.b16 %v478, %v474
        %v523 = vpack.c.b16 %v479, %v475
        %v524 = vpack.c.b16 %v480, %v476
        %v525 = vpack.c.b16 %v485, %v481
        %v526 = vpack.c.b16 %v486, %v482
        %v527 = vpack.c.b16 %v487, %v483
        %v528 = vpack.c.b16 %v488, %v484
        %v529 = vpack.c.b16 %v493, %v489
        %v530 = vpack.c.b16 %v494, %v490
        %v531 = vpack.c.b16 %v495, %v491
        %v532 = vpack.c.b16 %v496, %v492
        %v533 = vpack.c.b16 %v501, %v497
        %v534 = vpack.c.b16 %v502, %v498
        %v535 = vpack.c.b16 %v503, %v499
        %v536 = vpack.c.b16 %v504, %v500
        %569 = vmatprep.subr.bf16.mxu0 %v506
        %570 = vmatpush1.bf16.msra.mxu0 %v505
        %571 = vmatprep.subr.bf16.mxu0 %v510
        %572 = vmatpush1.bf16.msra.mxu0 %v509
        %573 = vmatprep.subr.bf16.mxu0 %v514
        %574 = vmatpush1.bf16.msra.mxu0 %v513
        %575 = vmatprep.subr.bf16.mxu0 %v518
        %576 = vmatpush1.bf16.msra.mxu0 %v517
        %577 = vmatprep.subr.bf16.mxu0 %v522
        %578 = vmatpush1.bf16.msra.mxu0 %v521
        %579 = vmatprep.subr.bf16.mxu0 %v526
        %580 = vmatpush1.bf16.msra.mxu0 %v525
        %581 = vmatprep.subr.bf16.mxu0 %v530
        %582 = vmatpush1.bf16.msra.mxu0 %v529
        %583 = vmatprep.subr.bf16.mxu0 %v534
        %584 = vmatpush1.bf16.msra.mxu0 %v533
        %585 = vmatprep.subr.bf16.mxu0 0
        %586 = vmatpush1.bf16.msra.mxu0 0
        %587 = vmatprep.subr.bf16.mxu0 0
        %588 = vmatpush1.bf16.msra.mxu0 0
        %589 = vmatprep.subr.bf16.mxu0 0
        %590 = vmatpush1.bf16.msra.mxu0 0
        %591 = vmatprep.subr.bf16.mxu0 0
        %592 = vmatpush1.bf16.msra.mxu0 0
        %593 = vmatprep.subr.bf16.mxu0 0
        %594 = vmatpush1.bf16.msra.mxu0 0
        %595 = vmatprep.subr.bf16.mxu0 0
        %596 = vmatpush1.bf16.msra.mxu0 0
        %597 = vmatprep.subr.bf16.mxu0 0
        %598 = vmatpush1.bf16.msra.mxu0 0
        %599 = vmatprep.subr.bf16.mxu0 0
        %600 = vmatpush1.bf16.msra.mxu0 0
        %601 = vmatprep.mubr.bf16.mxu0 0
        %602 = vmatmul.mubr.bf16.gmra.mrb[0].mxu0 %v407
        %v603 = vpop.f32.mrb[0].mxu0
        %v604 = vadd.f32 0.0, %v603
        %v605 = vpop.f32.mrb[0].mxu0
        %v606 = vadd.f32 0.0, %v605
        %v607 = vpop.f32.mrb[0].mxu0
        %v608 = vadd.f32 0.0, %v607
        %v609 = vpop.f32.mrb[0].mxu0
        %v610 = vadd.f32 0.0, %v609
        %611 = vmatprep.mubr.bf16.mxu0 0
        %612 = vmatmul.mubr.bf16.gmra.mrb[0].mxu0 %v408
        %v613 = vpop.f32.mrb[0].mxu0
        %v614 = vadd.f32 0.0, %v613
        %v615 = vpop.f32.mrb[0].mxu0
        %v616 = vadd.f32 0.0, %v615
        %v617 = vpop.f32.mrb[0].mxu0
        %v618 = vadd.f32 0.0, %v617
        %v619 = vpop.f32.mrb[0].mxu0
        %v620 = vadd.f32 0.0, %v619
        %621 = vdwg.mxu0
        %622 = vmatprep.subr.bf16.mxu0 %v508
        %623 = vmatpush1.bf16.msra.mxu0 %v507
        %624 = vmatprep.subr.bf16.mxu0 %v512
        %625 = vmatpush1.bf16.msra.mxu0 %v511
        %626 = vmatprep.subr.bf16.mxu0 %v516
        %627 = vmatpush1.bf16.msra.mxu0 %v515
        %628 = vmatprep.subr.bf16.mxu0 %v520
        %629 = vmatpush1.bf16.msra.mxu0 %v519
        %630 = vmatprep.subr.bf16.mxu0 %v524
        %631 = vmatpush1.bf16.msra.mxu0 %v523
        %632 = vmatprep.subr.bf16.mxu0 %v528
        %633 = vmatpush1.bf16.msra.mxu0 %v527
        %634 = vmatprep.subr.bf16.mxu0 %v532
        %635 = vmatpush1.bf16.msra.mxu0 %v531
        %636 = vmatprep.subr.bf16.mxu0 %v536
        %637 = vmatpush1.bf16.msra.mxu0 %v535
        %638 = vmatprep.subr.bf16.mxu0 0
        %639 = vmatpush1.bf16.msra.mxu0 0
        %640 = vmatprep.subr.bf16.mxu0 0
        %641 = vmatpush1.bf16.msra.mxu0 0
        %642 = vmatprep.subr.bf16.mxu0 0
        %643 = vmatpush1.bf16.msra.mxu0 0
        %644 = vmatprep.subr.bf16.mxu0 0
        %645 = vmatpush1.bf16.msra.mxu0 0
        %646 = vmatprep.subr.bf16.mxu0 0
        %647 = vmatpush1.bf16.msra.mxu0 0
        %648 = vmatprep.subr.bf16.mxu0 0
        %649 = vmatpush1.bf16.msra.mxu0 0
        %650 = vmatprep.subr.bf16.mxu0 0
        %651 = vmatpush1.bf16.msra.mxu0 0
        %652 = vmatprep.subr.bf16.mxu0 0
        %653 = vmatpush1.bf16.msra.mxu0 0
        %654 = vmatprep.mubr.bf16.mxu0 0
        %655 = vmatmul.mubr.bf16.gmra.mrb[0].mxu0 %v407
        %v656 = vpop.f32.mrb[0].mxu0
        %v657 = vadd.f32 0.0, %v656
        %v658 = vpop.f32.mrb[0].mxu0
        %v659 = vadd.f32 0.0, %v658
        %v660 = vpop.f32.mrb[0].mxu0
        %v661 = vadd.f32 0.0, %v660
        %v662 = vpop.f32.mrb[0].mxu0
        %v663 = vadd.f32 0.0, %v662
        %664 = vmatprep.mubr.bf16.mxu0 0
        %665 = vmatmul.mubr.bf16.gmra.mrb[0].mxu0 %v408
        %v666 = vpop.f32.mrb[0].mxu0
        %v667 = vadd.f32 0.0, %v666
        %v668 = vpop.f32.mrb[0].mxu0
        %v669 = vadd.f32 0.0, %v668
        %v670 = vpop.f32.mrb[0].mxu0
        %v671 = vadd.f32 0.0, %v670
        %v672 = vpop.f32.mrb[0].mxu0
        %v673 = vadd.f32 0.0, %v672
        %674 = vdwg.mxu0
        %v675 = vld [vmem:[#allocation8] sm:$0xff]
        %v676 = vld [vmem:[#allocation8 + $0x8] sm:$0xff]
        %s677 = scalar_lea.vmem [#allocation8], 16
        %v678 = vld [vmem:[%s677] sm:$0xff]
        %v679 = vld [vmem:[%s677 + $0x8] sm:$0xff]
        %vm680 = vcmask 261120
        %v682 = vsel %vm680, %v678, 0
        %v685 = vsel %vm680, %v679, 0
        %687 = vmatprep.subr.mxu0 0.0
        %688 = vmatpush1.msra.mxu0 %v606
        %689 = vmatprep.subr.mxu0 0.0
        %690 = vmatpush1.msra.mxu0 %v610
        %691 = vmatprep.subr.mxu0 0.0
        %692 = vmatpush1.msra.mxu0 %v616
        %693 = vmatprep.subr.mxu0 0.0
        %694 = vmatpush1.msra.mxu0 %v620
        %695 = vmatprep.subr.mxu0 0.0
        %696 = vmatpush1.msra.mxu0 0.0
        %697 = vmatprep.subr.mxu0 0.0
        %698 = vmatpush1.msra.mxu0 0.0
        %699 = vmatprep.subr.mxu0 0.0
        %700 = vmatpush1.msra.mxu0 0.0
        %701 = vmatprep.subr.mxu0 0.0
        %702 = vmatpush1.msra.mxu0 0.0
        %703 = vmatprep.subr.mxu0 0.0
        %704 = vmatpush1.msra.mxu0 0.0
        %705 = vmatprep.subr.mxu0 0.0
        %706 = vmatpush1.msra.mxu0 0.0
        %707 = vmatprep.subr.mxu0 0.0
        %708 = vmatpush1.msra.mxu0 0.0
        %709 = vmatprep.subr.mxu0 0.0
        %710 = vmatpush1.msra.mxu0 0.0
        %711 = vmatprep.subr.mxu0 0.0
        %712 = vmatpush1.msra.mxu0 0.0
        %713 = vmatprep.subr.mxu0 0.0
        %714 = vmatpush1.msra.mxu0 0.0
        %715 = vmatprep.subr.mxu0 0.0
        %716 = vmatpush1.msra.mxu0 0.0
        %717 = vmatprep.subr.mxu0 0.0
        %718 = vmatpush1.msra.mxu0 0.0
        %719 = vmatprep.subr.mxu0 0.0
        %720 = vmatpush1.msra.mxu0 0.0
        %721 = vmatprep.subr.mxu0 0.0
        %722 = vmatpush1.msra.mxu0 0.0
        %723 = vmatprep.subr.mxu0 0.0
        %724 = vmatpush1.msra.mxu0 0.0
        %725 = vmatprep.subr.mxu0 0.0
        %726 = vmatpush1.msra.mxu0 0.0
        %727 = vmatprep.subr.mxu0 0.0
        %728 = vmatpush1.msra.mxu0 0.0
        %729 = vmatprep.subr.mxu0 0.0
        %730 = vmatpush1.msra.mxu0 0.0
        %731 = vmatprep.subr.mxu0 0.0
        %732 = vmatpush1.msra.mxu0 0.0
        %733 = vmatprep.subr.mxu0 0.0
        %734 = vmatpush1.msra.mxu0 0.0
        %735 = vmatprep.subr.mxu0 0.0
        %736 = vmatpush1.msra.mxu0 0.0
        %737 = vmatprep.subr.mxu0 0.0
        %738 = vmatpush1.msra.mxu0 0.0
        %739 = vmatprep.subr.mxu0 0.0
        %740 = vmatpush1.msra.mxu0 0.0
        %741 = vmatprep.subr.mxu0 0.0
        %742 = vmatpush1.msra.mxu0 0.0
        %743 = vmatprep.subr.mxu0 0.0
        %744 = vmatpush1.msra.mxu0 0.0
        %745 = vmatprep.subr.mxu0 0.0
        %746 = vmatpush1.msra.mxu0 0.0
        %747 = vmatprep.subr.mxu0 0.0
        %748 = vmatpush1.msra.mxu0 0.0
        %749 = vmatprep.subr.mxu0 0.0
        %750 = vmatpush1.msra.mxu0 0.0
        %751 = vmatprep.mubr.f32.mxu0 0.0
        %752 = vmatmul.mubr.f32.gmra.mrb[0].mxu0 %v682
        %v753 = vpop.f32.mrb[0].mxu0
        %v754 = vadd.f32 0.0, %v753
        %v755 = vpop.f32.mrb[0].mxu0
        %756 = vmatprep.mubr.f32.mxu0 0.0
        %757 = vmatmul.mubr.f32.gmra.mrb[0].mxu0 %v685
        %v758 = vpop.f32.mrb[0].mxu0
        %v759 = vadd.f32 0.0, %v758
        %v760 = vpop.f32.mrb[0].mxu0
        %761 = vdwg.mxu0
        %v763 = vsel %vm680, %v675, 0
        %v766 = vsel %vm680, %v676, 0
        %768 = vmatprep.subr.mxu0 0.0
        %769 = vmatpush1.msra.mxu0 %v604
        %770 = vmatprep.subr.mxu0 0.0
        %771 = vmatpush1.msra.mxu0 %v608
        %772 = vmatprep.subr.mxu0 0.0
        %773 = vmatpush1.msra.mxu0 %v614
        %774 = vmatprep.subr.mxu0 0.0
        %775 = vmatpush1.msra.mxu0 %v618
        %776 = vmatprep.subr.mxu0 0.0
        %777 = vmatpush1.msra.mxu0 0.0
        %778 = vmatprep.subr.mxu0 0.0
        %779 = vmatpush1.msra.mxu0 0.0
        %780 = vmatprep.subr.mxu0 0.0
        %781 = vmatpush1.msra.mxu0 0.0
        %782 = vmatprep.subr.mxu0 0.0
        %783 = vmatpush1.msra.mxu0 0.0
        %784 = vmatprep.subr.mxu0 0.0
        %785 = vmatpush1.msra.mxu0 0.0
        %786 = vmatprep.subr.mxu0 0.0
        %787 = vmatpush1.msra.mxu0 0.0
        %788 = vmatprep.subr.mxu0 0.0
        %789 = vmatpush1.msra.mxu0 0.0
        %790 = vmatprep.subr.mxu0 0.0
        %791 = vmatpush1.msra.mxu0 0.0
        %792 = vmatprep.subr.mxu0 0.0
        %793 = vmatpush1.msra.mxu0 0.0
        %794 = vmatprep.subr.mxu0 0.0
        %795 = vmatpush1.msra.mxu0 0.0
        %796 = vmatprep.subr.mxu0 0.0
        %797 = vmatpush1.msra.mxu0 0.0
        %798 = vmatprep.subr.mxu0 0.0
        %799 = vmatpush1.msra.mxu0 0.0
        %800 = vmatprep.subr.mxu0 0.0
        %801 = vmatpush1.msra.mxu0 0.0
        %802 = vmatprep.subr.mxu0 0.0
        %803 = vmatpush1.msra.mxu0 0.0
        %804 = vmatprep.subr.mxu0 0.0
        %805 = vmatpush1.msra.mxu0 0.0
        %806 = vmatprep.subr.mxu0 0.0
        %807 = vmatpush1.msra.mxu0 0.0
        %808 = vmatprep.subr.mxu0 0.0
        %809 = vmatpush1.msra.mxu0 0.0
        %810 = vmatprep.subr.mxu0 0.0
        %811 = vmatpush1.msra.mxu0 0.0
        %812 = vmatprep.subr.mxu0 0.0
        %813 = vmatpush1.msra.mxu0 0.0
        %814 = vmatprep.subr.mxu0 0.0
        %815 = vmatpush1.msra.mxu0 0.0
        %816 = vmatprep.subr.mxu0 0.0
        %817 = vmatpush1.msra.mxu0 0.0
        %818 = vmatprep.subr.mxu0 0.0
        %819 = vmatpush1.msra.mxu0 0.0
        %820 = vmatprep.subr.mxu0 0.0
        %821 = vmatpush1.msra.mxu0 0.0
        %822 = vmatprep.subr.mxu0 0.0
        %823 = vmatpush1.msra.mxu0 0.0
        %824 = vmatprep.subr.mxu0 0.0
        %825 = vmatpush1.msra.mxu0 0.0
        %826 = vmatprep.subr.mxu0 0.0
        %827 = vmatpush1.msra.mxu0 0.0
        %828 = vmatprep.subr.mxu0 0.0
        %829 = vmatpush1.msra.mxu0 0.0
        %830 = vmatprep.subr.mxu0 0.0
        %831 = vmatpush1.msra.mxu0 0.0
        %832 = vmatprep.mubr.f32.mxu0 0.0
        %833 = vmatmul.mubr.f32.gmra.mrb[0].mxu0 %v763
        %v834 = vpop.f32.mrb[0].mxu0
        %v835 = vadd.f32 %v754, %v834
        %v836 = vpop.f32.mrb[0].mxu0
        %837 = vmatprep.mubr.f32.mxu0 0.0
        %838 = vmatmul.mubr.f32.gmra.mrb[0].mxu0 %v766
        %v839 = vpop.f32.mrb[0].mxu0
        %v840 = vadd.f32 %v759, %v839
        %v841 = vpop.f32.mrb[0].mxu0
        %842 = vdwg.mxu0
        %s843 = scalar_lea.vmem [#allocation8], 32
        %v844 = vld [vmem:[%s843] sm:$0xff]
        %v845 = vld [vmem:[%s843 + $0x8] sm:$0xff]
        %v847 = vsel %vm680, %v844, 0
        %v850 = vsel %vm680, %v845, 0
        %852 = vmatprep.subr.mxu0 0.0
        %853 = vmatpush1.msra.mxu0 %v657
        %854 = vmatprep.subr.mxu0 0.0
        %855 = vmatpush1.msra.mxu0 %v661
        %856 = vmatprep.subr.mxu0 0.0
        %857 = vmatpush1.msra.mxu0 %v667
        %858 = vmatprep.subr.mxu0 0.0
        %859 = vmatpush1.msra.mxu0 %v671
        %860 = vmatprep.subr.mxu0 0.0
        %861 = vmatpush1.msra.mxu0 0.0
        %862 = vmatprep.subr.mxu0 0.0
        %863 = vmatpush1.msra.mxu0 0.0
        %864 = vmatprep.subr.mxu0 0.0
        %865 = vmatpush1.msra.mxu0 0.0
        %866 = vmatprep.subr.mxu0 0.0
        %867 = vmatpush1.msra.mxu0 0.0
        %868 = vmatprep.subr.mxu0 0.0
        %869 = vmatpush1.msra.mxu0 0.0
        %870 = vmatprep.subr.mxu0 0.0
        %871 = vmatpush1.msra.mxu0 0.0
        %872 = vmatprep.subr.mxu0 0.0
        %873 = vmatpush1.msra.mxu0 0.0
        %874 = vmatprep.subr.mxu0 0.0
        %875 = vmatpush1.msra.mxu0 0.0
        %876 = vmatprep.subr.mxu0 0.0
        %877 = vmatpush1.msra.mxu0 0.0
        %878 = vmatprep.subr.mxu0 0.0
        %879 = vmatpush1.msra.mxu0 0.0
        %880 = vmatprep.subr.mxu0 0.0
        %881 = vmatpush1.msra.mxu0 0.0
        %882 = vmatprep.subr.mxu0 0.0
        %883 = vmatpush1.msra.mxu0 0.0
        %884 = vmatprep.subr.mxu0 0.0
        %885 = vmatpush1.msra.mxu0 0.0
        %886 = vmatprep.subr.mxu0 0.0
        %887 = vmatpush1.msra.mxu0 0.0
        %888 = vmatprep.subr.mxu0 0.0
        %889 = vmatpush1.msra.mxu0 0.0
        %890 = vmatprep.subr.mxu0 0.0
        %891 = vmatpush1.msra.mxu0 0.0
        %892 = vmatprep.subr.mxu0 0.0
        %893 = vmatpush1.msra.mxu0 0.0
        %894 = vmatprep.subr.mxu0 0.0
        %895 = vmatpush1.msra.mxu0 0.0
        %896 = vmatprep.subr.mxu0 0.0
        %897 = vmatpush1.msra.mxu0 0.0
        %898 = vmatprep.subr.mxu0 0.0
        %899 = vmatpush1.msra.mxu0 0.0
        %900 = vmatprep.subr.mxu0 0.0
        %901 = vmatpush1.msra.mxu0 0.0
        %902 = vmatprep.subr.mxu0 0.0
        %903 = vmatpush1.msra.mxu0 0.0
        %904 = vmatprep.subr.mxu0 0.0
        %905 = vmatpush1.msra.mxu0 0.0
        %906 = vmatprep.subr.mxu0 0.0
        %907 = vmatpush1.msra.mxu0 0.0
        %908 = vmatprep.subr.mxu0 0.0
        %909 = vmatpush1.msra.mxu0 0.0
        %910 = vmatprep.subr.mxu0 0.0
        %911 = vmatpush1.msra.mxu0 0.0
        %912 = vmatprep.subr.mxu0 0.0
        %913 = vmatpush1.msra.mxu0 0.0
        %914 = vmatprep.subr.mxu0 0.0
        %915 = vmatpush1.msra.mxu0 0.0
        %916 = vmatprep.mubr.f32.mxu0 0.0
        %917 = vmatmul.mubr.f32.gmra.mrb[0].mxu0 %v847
        %v918 = vpop.f32.mrb[0].mxu0
        %v919 = vadd.f32 0.0, %v918
        %v920 = vpop.f32.mrb[0].mxu0
        %921 = vmatprep.mubr.f32.mxu0 0.0
        %922 = vmatmul.mubr.f32.gmra.mrb[0].mxu0 %v850
        %v923 = vpop.f32.mrb[0].mxu0
        %v924 = vadd.f32 0.0, %v923
        %v925 = vpop.f32.mrb[0].mxu0
        %926 = vdwg.mxu0
        %v927 = vadd.f32 %v835, %v919
        %v928 = vadd.f32 %v840, %v924
        %s929 = scalar_lea.vmem [#allocation8], 48
        %v930 = vld [vmem:[%s929] sm:$0xff]
        %v931 = vld [vmem:[%s929 + $0x8] sm:$0xff]
        %v933 = vsel %vm680, %v930, 0
        %v936 = vsel %vm680, %v931, 0
        %938 = vmatprep.subr.mxu0 0.0
        %939 = vmatpush1.msra.mxu0 %v659
        %940 = vmatprep.subr.mxu0 0.0
        %941 = vmatpush1.msra.mxu0 %v663
        %942 = vmatprep.subr.mxu0 0.0
        %943 = vmatpush1.msra.mxu0 %v669
        %944 = vmatprep.subr.mxu0 0.0
        %945 = vmatpush1.msra.mxu0 %v673
        %946 = vmatprep.subr.mxu0 0.0
        %947 = vmatpush1.msra.mxu0 0.0
        %948 = vmatprep.subr.mxu0 0.0
        %949 = vmatpush1.msra.mxu0 0.0
        %950 = vmatprep.subr.mxu0 0.0
        %951 = vmatpush1.msra.mxu0 0.0
        %952 = vmatprep.subr.mxu0 0.0
        %953 = vmatpush1.msra.mxu0 0.0
        %954 = vmatprep.subr.mxu0 0.0
        %955 = vmatpush1.msra.mxu0 0.0
        %956 = vmatprep.subr.mxu0 0.0
        %957 = vmatpush1.msra.mxu0 0.0
        %958 = vmatprep.subr.mxu0 0.0
        %959 = vmatpush1.msra.mxu0 0.0
        %960 = vmatprep.subr.mxu0 0.0
        %961 = vmatpush1.msra.mxu0 0.0
        %962 = vmatprep.subr.mxu0 0.0
        %963 = vmatpush1.msra.mxu0 0.0
        %964 = vmatprep.subr.mxu0 0.0
        %965 = vmatpush1.msra.mxu0 0.0
        %966 = vmatprep.subr.mxu0 0.0
        %967 = vmatpush1.msra.mxu0 0.0
        %968 = vmatprep.subr.mxu0 0.0
        %969 = vmatpush1.msra.mxu0 0.0
        %970 = vmatprep.subr.mxu0 0.0
        %971 = vmatpush1.msra.mxu0 0.0
        %972 = vmatprep.subr.mxu0 0.0
        %973 = vmatpush1.msra.mxu0 0.0
        %974 = vmatprep.subr.mxu0 0.0
        %975 = vmatpush1.msra.mxu0 0.0
        %976 = vmatprep.subr.mxu0 0.0
        %977 = vmatpush1.msra.mxu0 0.0
        %978 = vmatprep.subr.mxu0 0.0
        %979 = vmatpush1.msra.mxu0 0.0
        %980 = vmatprep.subr.mxu0 0.0
        %981 = vmatpush1.msra.mxu0 0.0
        %982 = vmatprep.subr.mxu0 0.0
        %983 = vmatpush1.msra.mxu0 0.0
        %984 = vmatprep.subr.mxu0 0.0
        %985 = vmatpush1.msra.mxu0 0.0
        %986 = vmatprep.subr.mxu0 0.0
        %987 = vmatpush1.msra.mxu0 0.0
        %988 = vmatprep.subr.mxu0 0.0
        %989 = vmatpush1.msra.mxu0 0.0
        %990 = vmatprep.subr.mxu0 0.0
        %991 = vmatpush1.msra.mxu0 0.0
        %992 = vmatprep.subr.mxu0 0.0
        %993 = vmatpush1.msra.mxu0 0.0
        %994 = vmatprep.subr.mxu0 0.0
        %995 = vmatpush1.msra.mxu0 0.0
        %996 = vmatprep.subr.mxu0 0.0
        %997 = vmatpush1.msra.mxu0 0.0
        %998 = vmatprep.subr.mxu0 0.0
        %999 = vmatpush1.msra.mxu0 0.0
        %1000 = vmatprep.subr.mxu0 0.0
        %1001 = vmatpush1.msra.mxu0 0.0
        %1002 = vmatprep.mubr.f32.mxu0 0.0
        %1003 = vmatmul.mubr.f32.gmra.mrb[0].mxu0 %v933
        %v1004 = vpop.f32.mrb[0].mxu0
        %v1005 = vadd.f32 0.0, %v1004
        %v1006 = vpop.f32.mrb[0].mxu0
        %1007 = vmatprep.mubr.f32.mxu0 0.0
        %1008 = vmatmul.mubr.f32.gmra.mrb[0].mxu0 %v936
        %v1009 = vpop.f32.mrb[0].mxu0
        %v1010 = vadd.f32 0.0, %v1009
        %v1011 = vpop.f32.mrb[0].mxu0
        %1012 = vdwg.mxu0
        %v1013 = vadd.f32 %v927, %v1005
        %v1014 = vadd.f32 %v928, %v1010
        %v1015 = vld [vmem:[#allocation7] sm:$0x1]
        %v1016 = vlaneseq
        %v1017 = vshrl.u32 %v1016, 7
        %v1018 = vsub.s32 0, %v1017
        %v1019 = vrot.slane %v1015, %v1018
        %v1020 = vadd.f32 %v1013, %v1019
        %v1021 = vadd.f32 %v1014, %v1019
        %vm1022 = vcmp.ge.f32.partialorder %v1020, 0.0
        %vm1023 = vcmp.ge.f32.partialorder %v1021, 0.0
        %v1024 = vmul.f32 %v1020, 0.01
        %v1025 = vmul.f32 %v1021, 0.01
        %v1026 = vsel %vm1022, %v1020, %v1024
        %v1027 = vsel %vm1023, %v1021, %v1025
        %v1028 = vld [vmem:[#allocation5 + $0x10] sm:$0xff]
        %v1029 = vld [vmem:[#allocation5 + $0x18] sm:$0xff]
        %v1030 = vld [vmem:[#allocation5 + $0x4c] sm:$0xff]
        %v1031 = vld [vmem:[#allocation5 + $0x54] sm:$0xff]
        %v1032 = vld [vmem:[#allocation5 + $0x88] sm:$0xff]
        %v1033 = vld [vmem:[#allocation5 + $0x90] sm:$0xff]
        %v1034 = vld [vmem:[#allocation5 + $0xc4] sm:$0xff]
        %v1035 = vld [vmem:[#allocation5 + $0xcc] sm:$0xff]
        %v1036 = vld [vmem:[#allocation5 + $0x100] sm:$0xff]
        %v1037 = vld [vmem:[#allocation5 + $0x108] sm:$0xff]
        %v1038 = vld [vmem:[#allocation5 + $0x13c] sm:$0xff]
        %v1039 = vld [vmem:[#allocation5 + $0x144] sm:$0xff]
        %v1040 = vld [vmem:[#allocation5 + $0x178] sm:$0xff]
        %v1041 = vld [vmem:[#allocation5 + $0x180] sm:$0xff]
        %v1042 = vld [vmem:[#allocation5 + $0x1b4] sm:$0xff]
        %v1043 = vld [vmem:[#allocation5 + $0x1bc] sm:$0xff]
        %v1044 = vld [vmem:[#allocation5 + $0x1f0] sm:$0xff]
        %v1045 = vld [vmem:[#allocation5 + $0x1f8] sm:$0xff]
        %v1046 = vld [vmem:[#allocation5 + $0x22c] sm:$0xff]
        %v1047 = vld [vmem:[#allocation5 + $0x234] sm:$0xff]
        %v1048 = vld [vmem:[#allocation5 + $0x268] sm:$0xff]
        %v1049 = vld [vmem:[#allocation5 + $0x270] sm:$0xff]
        %v1050 = vld [vmem:[#allocation5 + $0x2a4] sm:$0xff]
        %v1051 = vld [vmem:[#allocation5 + $0x2ac] sm:$0xff]
        %v1052 = vld [vmem:[#allocation5 + $0x2e0] sm:$0xff]
        %v1053 = vld [vmem:[#allocation5 + $0x2e8] sm:$0xff]
        %v1054 = vld [vmem:[#allocation5 + $0x31c] sm:$0xff]
        %v1055 = vld [vmem:[#allocation5 + $0x324] sm:$0xff]
        %v1056 = vld [vmem:[#allocation5 + $0x358] sm:$0xff]
        %v1057 = vld [vmem:[#allocation5 + $0x360] sm:$0xff]
        %v1058 = vld [vmem:[#allocation5 + $0x394] sm:$0xff]
        %v1059 = vld [vmem:[#allocation5 + $0x39c] sm:$0xff]
        %v1060 = vpack.c.bf16 %v1027, %v1026
        %v1093 = vunpack.c.l.b16 %v1028
        %v1094 = vunpack.c.h.b16 %v1028
        %v1095 = vunpack.c.l.b16 %v1029
        %v1096 = vunpack.c.h.b16 %v1029
        %v1097 = vunpack.c.l.b16 %v1030
        %v1098 = vunpack.c.h.b16 %v1030
        %v1099 = vunpack.c.l.b16 %v1031
        %v1100 = vunpack.c.h.b16 %v1031
        %v1101 = vunpack.c.l.b16 %v1032
        %v1102 = vunpack.c.h.b16 %v1032
        %v1103 = vunpack.c.l.b16 %v1033
        %v1104 = vunpack.c.h.b16 %v1033
        %v1105 = vunpack.c.l.b16 %v1034
        %v1106 = vunpack.c.h.b16 %v1034
        %v1107 = vunpack.c.l.b16 %v1035
        %v1108 = vunpack.c.h.b16 %v1035
        %v1109 = vunpack.c.l.b16 %v1036
        %v1110 = vunpack.c.h.b16 %v1036
        %v1111 = vunpack.c.l.b16 %v1037
        %v1112 = vunpack.c.h.b16 %v1037
        %v1113 = vunpack.c.l.b16 %v1038
        %v1114 = vunpack.c.h.b16 %v1038
        %v1115 = vunpack.c.l.b16 %v1039
        %v1116 = vunpack.c.h.b16 %v1039
        %v1117 = vunpack.c.l.b16 %v1040
        %v1118 = vunpack.c.h.b16 %v1040
        %v1119 = vunpack.c.l.b16 %v1041
        %v1120 = vunpack.c.h.b16 %v1041
        %v1121 = vunpack.c.l.b16 %v1042
        %v1122 = vunpack.c.h.b16 %v1042
        %v1123 = vunpack.c.l.b16 %v1043
        %v1124 = vunpack.c.h.b16 %v1043
        %v1125 = vunpack.c.l.b16 %v1044
        %v1126 = vunpack.c.h.b16 %v1044
        %v1127 = vunpack.c.l.b16 %v1045
        %v1128 = vunpack.c.h.b16 %v1045
        %v1129 = vunpack.c.l.b16 %v1046
        %v1130 = vunpack.c.h.b16 %v1046
        %v1131 = vunpack.c.l.b16 %v1047
        %v1132 = vunpack.c.h.b16 %v1047
        %v1133 = vunpack.c.l.b16 %v1048
        %v1134 = vunpack.c.h.b16 %v1048
        %v1135 = vunpack.c.l.b16 %v1049
        %v1136 = vunpack.c.h.b16 %v1049
        %v1137 = vunpack.c.l.b16 %v1050
        %v1138 = vunpack.c.h.b16 %v1050
        %v1139 = vunpack.c.l.b16 %v1051
        %v1140 = vunpack.c.h.b16 %v1051
        %v1141 = vunpack.c.l.b16 %v1052
        %v1142 = vunpack.c.h.b16 %v1052
        %v1143 = vunpack.c.l.b16 %v1053
        %v1144 = vunpack.c.h.b16 %v1053
        %v1145 = vunpack.c.l.b16 %v1054
        %v1146 = vunpack.c.h.b16 %v1054
        %v1147 = vunpack.c.l.b16 %v1055
        %v1148 = vunpack.c.h.b16 %v1055
        %v1149 = vunpack.c.l.b16 %v1056
        %v1150 = vunpack.c.h.b16 %v1056
        %v1151 = vunpack.c.l.b16 %v1057
        %v1152 = vunpack.c.h.b16 %v1057
        %v1153 = vunpack.c.l.b16 %v1058
        %v1154 = vunpack.c.h.b16 %v1058
        %v1155 = vunpack.c.l.b16 %v1059
        %v1156 = vunpack.c.h.b16 %v1059
        %v1157 = vpack.c.b16 %v1097, %v1093
        %v1158 = vpack.c.b16 %v1098, %v1094
        %v1159 = vpack.c.b16 %v1099, %v1095
        %v1160 = vpack.c.b16 %v1100, %v1096
        %v1161 = vpack.c.b16 %v1105, %v1101
        %v1162 = vpack.c.b16 %v1106, %v1102
        %v1163 = vpack.c.b16 %v1107, %v1103
        %v1164 = vpack.c.b16 %v1108, %v1104
        %v1165 = vpack.c.b16 %v1113, %v1109
        %v1166 = vpack.c.b16 %v1114, %v1110
        %v1167 = vpack.c.b16 %v1115, %v1111
        %v1168 = vpack.c.b16 %v1116, %v1112
        %v1169 = vpack.c.b16 %v1121, %v1117
        %v1170 = vpack.c.b16 %v1122, %v1118
        %v1171 = vpack.c.b16 %v1123, %v1119
        %v1172 = vpack.c.b16 %v1124, %v1120
        %v1173 = vpack.c.b16 %v1129, %v1125
        %v1174 = vpack.c.b16 %v1130, %v1126
        %v1175 = vpack.c.b16 %v1131, %v1127
        %v1176 = vpack.c.b16 %v1132, %v1128
        %v1177 = vpack.c.b16 %v1137, %v1133
        %v1178 = vpack.c.b16 %v1138, %v1134
        %v1179 = vpack.c.b16 %v1139, %v1135
        %v1180 = vpack.c.b16 %v1140, %v1136
        %v1181 = vpack.c.b16 %v1145, %v1141
        %v1182 = vpack.c.b16 %v1146, %v1142
        %v1183 = vpack.c.b16 %v1147, %v1143
        %v1184 = vpack.c.b16 %v1148, %v1144
        %v1185 = vpack.c.b16 %v1153, %v1149
        %v1186 = vpack.c.b16 %v1154, %v1150
        %v1187 = vpack.c.b16 %v1155, %v1151
        %v1188 = vpack.c.b16 %v1156, %v1152
        %1221 = vmatprep.subr.bf16.mxu0 %v1158
        %1222 = vmatpush1.bf16.msra.mxu0 %v1157
        %1223 = vmatprep.subr.bf16.mxu0 %v1162
        %1224 = vmatpush1.bf16.msra.mxu0 %v1161
        %1225 = vmatprep.subr.bf16.mxu0 %v1166
        %1226 = vmatpush1.bf16.msra.mxu0 %v1165
        %1227 = vmatprep.subr.bf16.mxu0 %v1170
        %1228 = vmatpush1.bf16.msra.mxu0 %v1169
        %1229 = vmatprep.subr.bf16.mxu0 %v1174
        %1230 = vmatpush1.bf16.msra.mxu0 %v1173
        %1231 = vmatprep.subr.bf16.mxu0 %v1178
        %1232 = vmatpush1.bf16.msra.mxu0 %v1177
        %1233 = vmatprep.subr.bf16.mxu0 %v1182
        %1234 = vmatpush1.bf16.msra.mxu0 %v1181
        %1235 = vmatprep.subr.bf16.mxu0 %v1186
        %1236 = vmatpush1.bf16.msra.mxu0 %v1185
        %1237 = vmatprep.subr.bf16.mxu0 0
        %1238 = vmatpush1.bf16.msra.mxu0 0
        %1239 = vmatprep.subr.bf16.mxu0 0
        %1240 = vmatpush1.bf16.msra.mxu0 0
        %1241 = vmatprep.subr.bf16.mxu0 0
        %1242 = vmatpush1.bf16.msra.mxu0 0
        %1243 = vmatprep.subr.bf16.mxu0 0
        %1244 = vmatpush1.bf16.msra.mxu0 0
        %1245 = vmatprep.subr.bf16.mxu0 0
        %1246 = vmatpush1.bf16.msra.mxu0 0
        %1247 = vmatprep.subr.bf16.mxu0 0
        %1248 = vmatpush1.bf16.msra.mxu0 0
        %1249 = vmatprep.subr.bf16.mxu0 0
        %1250 = vmatpush1.bf16.msra.mxu0 0
        %1251 = vmatprep.subr.bf16.mxu0 0
        %1252 = vmatpush1.bf16.msra.mxu0 0
        %1253 = vmatprep.mubr.bf16.mxu0 0
        %1254 = vmatmul.mubr.bf16.gmra.mrb[0].mxu0 %v1060
        %v1255 = vpop.f32.mrb[0].mxu0
        %v1256 = vadd.f32 0.0, %v1255
        %v1257 = vpop.f32.mrb[0].mxu0
        %v1258 = vadd.f32 0.0, %v1257
        %v1259 = vpop.f32.mrb[0].mxu0
        %v1260 = vadd.f32 0.0, %v1259
        %v1261 = vpop.f32.mrb[0].mxu0
        %v1262 = vadd.f32 0.0, %v1261
        %1263 = vdwg.mxu0
        %1264 = vmatprep.subr.bf16.mxu0 %v1160
        %1265 = vmatpush1.bf16.msra.mxu0 %v1159
        %1266 = vmatprep.subr.bf16.mxu0 %v1164
        %1267 = vmatpush1.bf16.msra.mxu0 %v1163
        %1268 = vmatprep.subr.bf16.mxu0 %v1168
        %1269 = vmatpush1.bf16.msra.mxu0 %v1167
        %1270 = vmatprep.subr.bf16.mxu0 %v1172
        %1271 = vmatpush1.bf16.msra.mxu0 %v1171
        %1272 = vmatprep.subr.bf16.mxu0 %v1176
        %1273 = vmatpush1.bf16.msra.mxu0 %v1175
        %1274 = vmatprep.subr.bf16.mxu0 %v1180
        %1275 = vmatpush1.bf16.msra.mxu0 %v1179
        %1276 = vmatprep.subr.bf16.mxu0 %v1184
        %1277 = vmatpush1.bf16.msra.mxu0 %v1183
        %1278 = vmatprep.subr.bf16.mxu0 %v1188
        %1279 = vmatpush1.bf16.msra.mxu0 %v1187
        %1280 = vmatprep.subr.bf16.mxu0 0
        %1281 = vmatpush1.bf16.msra.mxu0 0
        %1282 = vmatprep.subr.bf16.mxu0 0
        %1283 = vmatpush1.bf16.msra.mxu0 0
        %1284 = vmatprep.subr.bf16.mxu0 0
        %1285 = vmatpush1.bf16.msra.mxu0 0
        %1286 = vmatprep.subr.bf16.mxu0 0
        %1287 = vmatpush1.bf16.msra.mxu0 0
        %1288 = vmatprep.subr.bf16.mxu0 0
        %1289 = vmatpush1.bf16.msra.mxu0 0
        %1290 = vmatprep.subr.bf16.mxu0 0
        %1291 = vmatpush1.bf16.msra.mxu0 0
        %1292 = vmatprep.subr.bf16.mxu0 0
        %1293 = vmatpush1.bf16.msra.mxu0 0
        %1294 = vmatprep.subr.bf16.mxu0 0
        %1295 = vmatpush1.bf16.msra.mxu0 0
        %1296 = vmatprep.mubr.bf16.mxu0 0
        %1297 = vmatmul.mubr.bf16.gmra.mrb[0].mxu0 %v1060
        %v1298 = vpop.f32.mrb[0].mxu0
        %v1299 = vadd.f32 0.0, %v1298
        %v1300 = vpop.f32.mrb[0].mxu0
        %v1301 = vadd.f32 0.0, %v1300
        %v1302 = vpop.f32.mrb[0].mxu0
        %v1303 = vadd.f32 0.0, %v1302
        %v1304 = vpop.f32.mrb[0].mxu0
        %v1305 = vadd.f32 0.0, %v1304
        %1306 = vdwg.mxu0
        %v1307 = vld [vmem:[#allocation10] sm:$0xff]
        %s1308 = scalar_lea.vmem [#allocation10], 8
        %v1309 = vld [vmem:[%s1308] sm:$0xff]
        %vm1310 = vcmask 130048
        %v1312 = vsel %vm1310, %v1309, 0
        %1314 = vmatprep.subr.mxu0 0.0
        %1315 = vmatpush1.msra.mxu0 %v1258
        %1316 = vmatprep.subr.mxu0 0.0
        %1317 = vmatpush1.msra.mxu0 %v1262
        %1318 = vmatprep.subr.mxu0 0.0
        %1319 = vmatpush1.msra.mxu0 0.0
        %1320 = vmatprep.subr.mxu0 0.0
        %1321 = vmatpush1.msra.mxu0 0.0
        %1322 = vmatprep.subr.mxu0 0.0
        %1323 = vmatpush1.msra.mxu0 0.0
        %1324 = vmatprep.subr.mxu0 0.0
        %1325 = vmatpush1.msra.mxu0 0.0
        %1326 = vmatprep.subr.mxu0 0.0
        %1327 = vmatpush1.msra.mxu0 0.0
        %1328 = vmatprep.subr.mxu0 0.0
        %1329 = vmatpush1.msra.mxu0 0.0
        %1330 = vmatprep.subr.mxu0 0.0
        %1331 = vmatpush1.msra.mxu0 0.0
        %1332 = vmatprep.subr.mxu0 0.0
        %1333 = vmatpush1.msra.mxu0 0.0
        %1334 = vmatprep.subr.mxu0 0.0
        %1335 = vmatpush1.msra.mxu0 0.0
        %1336 = vmatprep.subr.mxu0 0.0
        %1337 = vmatpush1.msra.mxu0 0.0
        %1338 = vmatprep.subr.mxu0 0.0
        %1339 = vmatpush1.msra.mxu0 0.0
        %1340 = vmatprep.subr.mxu0 0.0
        %1341 = vmatpush1.msra.mxu0 0.0
        %1342 = vmatprep.subr.mxu0 0.0
        %1343 = vmatpush1.msra.mxu0 0.0
        %1344 = vmatprep.subr.mxu0 0.0
        %1345 = vmatpush1.msra.mxu0 0.0
        %1346 = vmatprep.subr.mxu0 0.0
        %1347 = vmatpush1.msra.mxu0 0.0
        %1348 = vmatprep.subr.mxu0 0.0
        %1349 = vmatpush1.msra.mxu0 0.0
        %1350 = vmatprep.subr.mxu0 0.0
        %1351 = vmatpush1.msra.mxu0 0.0
        %1352 = vmatprep.subr.mxu0 0.0
        %1353 = vmatpush1.msra.mxu0 0.0
        %1354 = vmatprep.subr.mxu0 0.0
        %1355 = vmatpush1.msra.mxu0 0.0
        %1356 = vmatprep.subr.mxu0 0.0
        %1357 = vmatpush1.msra.mxu0 0.0
        %1358 = vmatprep.subr.mxu0 0.0
        %1359 = vmatpush1.msra.mxu0 0.0
        %1360 = vmatprep.subr.mxu0 0.0
        %1361 = vmatpush1.msra.mxu0 0.0
        %1362 = vmatprep.subr.mxu0 0.0
        %1363 = vmatpush1.msra.mxu0 0.0
        %1364 = vmatprep.subr.mxu0 0.0
        %1365 = vmatpush1.msra.mxu0 0.0
        %1366 = vmatprep.subr.mxu0 0.0
        %1367 = vmatpush1.msra.mxu0 0.0
        %1368 = vmatprep.subr.mxu0 0.0
        %1369 = vmatpush1.msra.mxu0 0.0
        %1370 = vmatprep.subr.mxu0 0.0
        %1371 = vmatpush1.msra.mxu0 0.0
        %1372 = vmatprep.subr.mxu0 0.0
        %1373 = vmatpush1.msra.mxu0 0.0
        %1374 = vmatprep.subr.mxu0 0.0
        %1375 = vmatpush1.msra.mxu0 0.0
        %1376 = vmatprep.subr.mxu0 0.0
        %1377 = vmatpush1.msra.mxu0 0.0
        %1378 = vmatprep.mubr.f32.mxu0 0.0
        %1379 = vmatmul.mubr.f32.gmra.mrb[0].mxu0 %v1312
        %v1380 = vpop.f32.mrb[0].mxu0
        %v1381 = vadd.f32 0.0, %v1380
        %v1382 = vpop.f32.mrb[0].mxu0
        %1383 = vdwg.mxu0
        %v1385 = vsel %vm1310, %v1307, 0
        %1387 = vmatprep.subr.mxu0 0.0
        %1388 = vmatpush1.msra.mxu0 %v1256
        %1389 = vmatprep.subr.mxu0 0.0
        %1390 = vmatpush1.msra.mxu0 %v1260
        %1391 = vmatprep.subr.mxu0 0.0
        %1392 = vmatpush1.msra.mxu0 0.0
        %1393 = vmatprep.subr.mxu0 0.0
        %1394 = vmatpush1.msra.mxu0 0.0
        %1395 = vmatprep.subr.mxu0 0.0
        %1396 = vmatpush1.msra.mxu0 0.0
        %1397 = vmatprep.subr.mxu0 0.0
        %1398 = vmatpush1.msra.mxu0 0.0
        %1399 = vmatprep.subr.mxu0 0.0
        %1400 = vmatpush1.msra.mxu0 0.0
        %1401 = vmatprep.subr.mxu0 0.0
        %1402 = vmatpush1.msra.mxu0 0.0
        %1403 = vmatprep.subr.mxu0 0.0
        %1404 = vmatpush1.msra.mxu0 0.0
        %1405 = vmatprep.subr.mxu0 0.0
        %1406 = vmatpush1.msra.mxu0 0.0
        %1407 = vmatprep.subr.mxu0 0.0
        %1408 = vmatpush1.msra.mxu0 0.0
        %1409 = vmatprep.subr.mxu0 0.0
        %1410 = vmatpush1.msra.mxu0 0.0
        %1411 = vmatprep.subr.mxu0 0.0
        %1412 = vmatpush1.msra.mxu0 0.0
        %1413 = vmatprep.subr.mxu0 0.0
        %1414 = vmatpush1.msra.mxu0 0.0
        %1415 = vmatprep.subr.mxu0 0.0
        %1416 = vmatpush1.msra.mxu0 0.0
        %1417 = vmatprep.subr.mxu0 0.0
        %1418 = vmatpush1.msra.mxu0 0.0
        %1419 = vmatprep.subr.mxu0 0.0
        %1420 = vmatpush1.msra.mxu0 0.0
        %1421 = vmatprep.subr.mxu0 0.0
        %1422 = vmatpush1.msra.mxu0 0.0
        %1423 = vmatprep.subr.mxu0 0.0
        %1424 = vmatpush1.msra.mxu0 0.0
        %1425 = vmatprep.subr.mxu0 0.0
        %1426 = vmatpush1.msra.mxu0 0.0
        %1427 = vmatprep.subr.mxu0 0.0
        %1428 = vmatpush1.msra.mxu0 0.0
        %1429 = vmatprep.subr.mxu0 0.0
        %1430 = vmatpush1.msra.mxu0 0.0
        %1431 = vmatprep.subr.mxu0 0.0
        %1432 = vmatpush1.msra.mxu0 0.0
        %1433 = vmatprep.subr.mxu0 0.0
        %1434 = vmatpush1.msra.mxu0 0.0
        %1435 = vmatprep.subr.mxu0 0.0
        %1436 = vmatpush1.msra.mxu0 0.0
        %1437 = vmatprep.subr.mxu0 0.0
        %1438 = vmatpush1.msra.mxu0 0.0
        %1439 = vmatprep.subr.mxu0 0.0
        %1440 = vmatpush1.msra.mxu0 0.0
        %1441 = vmatprep.subr.mxu0 0.0
        %1442 = vmatpush1.msra.mxu0 0.0
        %1443 = vmatprep.subr.mxu0 0.0
        %1444 = vmatpush1.msra.mxu0 0.0
        %1445 = vmatprep.subr.mxu0 0.0
        %1446 = vmatpush1.msra.mxu0 0.0
        %1447 = vmatprep.subr.mxu0 0.0
        %1448 = vmatpush1.msra.mxu0 0.0
        %1449 = vmatprep.subr.mxu0 0.0
        %1450 = vmatpush1.msra.mxu0 0.0
        %1451 = vmatprep.mubr.f32.mxu0 0.0
        %1452 = vmatmul.mubr.f32.gmra.mrb[0].mxu0 %v1385
        %v1453 = vpop.f32.mrb[0].mxu0
        %v1454 = vadd.f32 %v1381, %v1453
        %v1455 = vpop.f32.mrb[0].mxu0
        %1456 = vdwg.mxu0
        %s1457 = scalar_lea.vmem [#allocation10], 16
        %v1458 = vld [vmem:[%s1457] sm:$0xff]
        %v1460 = vsel %vm1310, %v1458, 0
        %1462 = vmatprep.subr.mxu0 0.0
        %1463 = vmatpush1.msra.mxu0 %v1299
        %1464 = vmatprep.subr.mxu0 0.0
        %1465 = vmatpush1.msra.mxu0 %v1303
        %1466 = vmatprep.subr.mxu0 0.0
        %1467 = vmatpush1.msra.mxu0 0.0
        %1468 = vmatprep.subr.mxu0 0.0
        %1469 = vmatpush1.msra.mxu0 0.0
        %1470 = vmatprep.subr.mxu0 0.0
        %1471 = vmatpush1.msra.mxu0 0.0
        %1472 = vmatprep.subr.mxu0 0.0
        %1473 = vmatpush1.msra.mxu0 0.0
        %1474 = vmatprep.subr.mxu0 0.0
        %1475 = vmatpush1.msra.mxu0 0.0
        %1476 = vmatprep.subr.mxu0 0.0
        %1477 = vmatpush1.msra.mxu0 0.0
        %1478 = vmatprep.subr.mxu0 0.0
        %1479 = vmatpush1.msra.mxu0 0.0
        %1480 = vmatprep.subr.mxu0 0.0
        %1481 = vmatpush1.msra.mxu0 0.0
        %1482 = vmatprep.subr.mxu0 0.0
        %1483 = vmatpush1.msra.mxu0 0.0
        %1484 = vmatprep.subr.mxu0 0.0
        %1485 = vmatpush1.msra.mxu0 0.0
        %1486 = vmatprep.subr.mxu0 0.0
        %1487 = vmatpush1.msra.mxu0 0.0
        %1488 = vmatprep.subr.mxu0 0.0
        %1489 = vmatpush1.msra.mxu0 0.0
        %1490 = vmatprep.subr.mxu0 0.0
        %1491 = vmatpush1.msra.mxu0 0.0
        %1492 = vmatprep.subr.mxu0 0.0
        %1493 = vmatpush1.msra.mxu0 0.0
        %1494 = vmatprep.subr.mxu0 0.0
        %1495 = vmatpush1.msra.mxu0 0.0
        %1496 = vmatprep.subr.mxu0 0.0
        %1497 = vmatpush1.msra.mxu0 0.0
        %1498 = vmatprep.subr.mxu0 0.0
        %1499 = vmatpush1.msra.mxu0 0.0
        %1500 = vmatprep.subr.mxu0 0.0
        %1501 = vmatpush1.msra.mxu0 0.0
        %1502 = vmatprep.subr.mxu0 0.0
        %1503 = vmatpush1.msra.mxu0 0.0
        %1504 = vmatprep.subr.mxu0 0.0
        %1505 = vmatpush1.msra.mxu0 0.0
        %1506 = vmatprep.subr.mxu0 0.0
        %1507 = vmatpush1.msra.mxu0 0.0
        %1508 = vmatprep.subr.mxu0 0.0
        %1509 = vmatpush1.msra.mxu0 0.0
        %1510 = vmatprep.subr.mxu0 0.0
        %1511 = vmatpush1.msra.mxu0 0.0
        %1512 = vmatprep.subr.mxu0 0.0
        %1513 = vmatpush1.msra.mxu0 0.0
        %1514 = vmatprep.subr.mxu0 0.0
        %1515 = vmatpush1.msra.mxu0 0.0
        %1516 = vmatprep.subr.mxu0 0.0
        %1517 = vmatpush1.msra.mxu0 0.0
        %1518 = vmatprep.subr.mxu0 0.0
        %1519 = vmatpush1.msra.mxu0 0.0
        %1520 = vmatprep.subr.mxu0 0.0
        %1521 = vmatpush1.msra.mxu0 0.0
        %1522 = vmatprep.subr.mxu0 0.0
        %1523 = vmatpush1.msra.mxu0 0.0
        %1524 = vmatprep.subr.mxu0 0.0
        %1525 = vmatpush1.msra.mxu0 0.0
        %1526 = vmatprep.mubr.f32.mxu0 0.0
        %1527 = vmatmul.mubr.f32.gmra.mrb[0].mxu0 %v1460
        %v1528 = vpop.f32.mrb[0].mxu0
        %v1529 = vadd.f32 0.0, %v1528
        %v1530 = vpop.f32.mrb[0].mxu0
        %1531 = vdwg.mxu0
        %v1532 = vadd.f32 %v1454, %v1529
        %s1533 = scalar_lea.vmem [#allocation10], 24
        %v1534 = vld [vmem:[%s1533] sm:$0xff]
        %v1536 = vsel %vm1310, %v1534, 0
        %1538 = vmatprep.subr.mxu0 0.0
        %1539 = vmatpush1.msra.mxu0 %v1301
        %1540 = vmatprep.subr.mxu0 0.0
        %1541 = vmatpush1.msra.mxu0 %v1305
        %1542 = vmatprep.subr.mxu0 0.0
        %1543 = vmatpush1.msra.mxu0 0.0
        %1544 = vmatprep.subr.mxu0 0.0
        %1545 = vmatpush1.msra.mxu0 0.0
        %1546 = vmatprep.subr.mxu0 0.0
        %1547 = vmatpush1.msra.mxu0 0.0
        %1548 = vmatprep.subr.mxu0 0.0
        %1549 = vmatpush1.msra.mxu0 0.0
        %1550 = vmatprep.subr.mxu0 0.0
        %1551 = vmatpush1.msra.mxu0 0.0
        %1552 = vmatprep.subr.mxu0 0.0
        %1553 = vmatpush1.msra.mxu0 0.0
        %1554 = vmatprep.subr.mxu0 0.0
        %1555 = vmatpush1.msra.mxu0 0.0
        %1556 = vmatprep.subr.mxu0 0.0
        %1557 = vmatpush1.msra.mxu0 0.0
        %1558 = vmatprep.subr.mxu0 0.0
        %1559 = vmatpush1.msra.mxu0 0.0
        %1560 = vmatprep.subr.mxu0 0.0
        %1561 = vmatpush1.msra.mxu0 0.0
        %1562 = vmatprep.subr.mxu0 0.0
        %1563 = vmatpush1.msra.mxu0 0.0
        %1564 = vmatprep.subr.mxu0 0.0
        %1565 = vmatpush1.msra.mxu0 0.0
        %1566 = vmatprep.subr.mxu0 0.0
        %1567 = vmatpush1.msra.mxu0 0.0
        %1568 = vmatprep.subr.mxu0 0.0
        %1569 = vmatpush1.msra.mxu0 0.0
        %1570 = vmatprep.subr.mxu0 0.0
        %1571 = vmatpush1.msra.mxu0 0.0
        %1572 = vmatprep.subr.mxu0 0.0
        %1573 = vmatpush1.msra.mxu0 0.0
        %1574 = vmatprep.subr.mxu0 0.0
        %1575 = vmatpush1.msra.mxu0 0.0
        %1576 = vmatprep.subr.mxu0 0.0
        %1577 = vmatpush1.msra.mxu0 0.0
        %1578 = vmatprep.subr.mxu0 0.0
        %1579 = vmatpush1.msra.mxu0 0.0
        %1580 = vmatprep.subr.mxu0 0.0
        %1581 = vmatpush1.msra.mxu0 0.0
        %1582 = vmatprep.subr.mxu0 0.0
        %1583 = vmatpush1.msra.mxu0 0.0
        %1584 = vmatprep.subr.mxu0 0.0
        %1585 = vmatpush1.msra.mxu0 0.0
        %1586 = vmatprep.subr.mxu0 0.0
        %1587 = vmatpush1.msra.mxu0 0.0
        %1588 = vmatprep.subr.mxu0 0.0
        %1589 = vmatpush1.msra.mxu0 0.0
        %1590 = vmatprep.subr.mxu0 0.0
        %1591 = vmatpush1.msra.mxu0 0.0
        %1592 = vmatprep.subr.mxu0 0.0
        %1593 = vmatpush1.msra.mxu0 0.0
        %1594 = vmatprep.subr.mxu0 0.0
        %1595 = vmatpush1.msra.mxu0 0.0
        %1596 = vmatprep.subr.mxu0 0.0
        %1597 = vmatpush1.msra.mxu0 0.0
        %1598 = vmatprep.subr.mxu0 0.0
        %1599 = vmatpush1.msra.mxu0 0.0
        %1600 = vmatprep.subr.mxu0 0.0
        %1601 = vmatpush1.msra.mxu0 0.0
        %1602 = vmatprep.mubr.f32.mxu0 0.0
        %1603 = vmatmul.mubr.f32.gmra.mrb[0].mxu0 %v1536
        %v1604 = vpop.f32.mrb[0].mxu0
        %v1605 = vadd.f32 0.0, %v1604
        %v1606 = vpop.f32.mrb[0].mxu0
        %1607 = vdwg.mxu0
        %v1608 = vadd.f32 %v1532, %v1605
        %v1609 = vld [vmem:[#allocation7 + $0x1] sm:$0x1]
        %v1610 = vlaneseq
        %v1611 = vshrl.u32 %v1610, 7
        %v1612 = vsub.s32 0, %v1611
        %v1613 = vrot.slane %v1609, %v1612
        %v1614 = vadd.f32 %v1608, %v1613
        %vm1615 = vcmp.ge.f32.partialorder %v1614, 0.0
        %v1616 = vmul.f32 %v1614, 0.01
        %v1617 = vsel %vm1615, %v1614, %v1616
        %v1618 = vld [vmem:[#allocation5 + $0x20] sm:$0xff]
        %v1619 = vld [vmem:[#allocation5 + $0x28] sm:$0xff]
        %v1620 = vld [vmem:[#allocation5 + $0x5c] sm:$0xff]
        %v1621 = vld [vmem:[#allocation5 + $0x64] sm:$0xff]
        %v1622 = vld [vmem:[#allocation5 + $0x98] sm:$0xff]
        %v1623 = vld [vmem:[#allocation5 + $0xa0] sm:$0xff]
        %v1624 = vld [vmem:[#allocation5 + $0xd4] sm:$0xff]
        %v1625 = vld [vmem:[#allocation5 + $0xdc] sm:$0xff]
        %v1626 = vld [vmem:[#allocation5 + $0x110] sm:$0xff]
        %v1627 = vld [vmem:[#allocation5 + $0x118] sm:$0xff]
        %v1628 = vld [vmem:[#allocation5 + $0x14c] sm:$0xff]
        %v1629 = vld [vmem:[#allocation5 + $0x154] sm:$0xff]
        %v1630 = vld [vmem:[#allocation5 + $0x188] sm:$0xff]
        %v1631 = vld [vmem:[#allocation5 + $0x190] sm:$0xff]
        %v1632 = vld [vmem:[#allocation5 + $0x1c4] sm:$0xff]
        %v1633 = vld [vmem:[#allocation5 + $0x1cc] sm:$0xff]
        %v1634 = vld [vmem:[#allocation5 + $0x200] sm:$0xff]
        %v1635 = vld [vmem:[#allocation5 + $0x208] sm:$0xff]
        %v1636 = vld [vmem:[#allocation5 + $0x23c] sm:$0xff]
        %v1637 = vld [vmem:[#allocation5 + $0x244] sm:$0xff]
        %v1638 = vld [vmem:[#allocation5 + $0x278] sm:$0xff]
        %v1639 = vld [vmem:[#allocation5 + $0x280] sm:$0xff]
        %v1640 = vld [vmem:[#allocation5 + $0x2b4] sm:$0xff]
        %v1641 = vld [vmem:[#allocation5 + $0x2bc] sm:$0xff]
        %v1642 = vld [vmem:[#allocation5 + $0x2f0] sm:$0xff]
        %v1643 = vld [vmem:[#allocation5 + $0x2f8] sm:$0xff]
        %v1644 = vld [vmem:[#allocation5 + $0x32c] sm:$0xff]
        %v1645 = vld [vmem:[#allocation5 + $0x334] sm:$0xff]
        %v1646 = vld [vmem:[#allocation5 + $0x368] sm:$0xff]
        %v1647 = vld [vmem:[#allocation5 + $0x370] sm:$0xff]
        %v1648 = vld [vmem:[#allocation5 + $0x3a4] sm:$0xff]
        %v1649 = vld [vmem:[#allocation5 + $0x3ac] sm:$0xff]
        %v1650 = vpack.c.bf16 %v1617, %v1617
        %v1683 = vunpack.c.l.b16 %v1618
        %v1684 = vunpack.c.h.b16 %v1618
        %v1685 = vunpack.c.l.b16 %v1619
        %v1686 = vunpack.c.h.b16 %v1619
        %v1687 = vunpack.c.l.b16 %v1620
        %v1688 = vunpack.c.h.b16 %v1620
        %v1689 = vunpack.c.l.b16 %v1621
        %v1690 = vunpack.c.h.b16 %v1621
        %v1691 = vunpack.c.l.b16 %v1622
        %v1692 = vunpack.c.h.b16 %v1622
        %v1693 = vunpack.c.l.b16 %v1623
        %v1694 = vunpack.c.h.b16 %v1623
        %v1695 = vunpack.c.l.b16 %v1624
        %v1696 = vunpack.c.h.b16 %v1624
        %v1697 = vunpack.c.l.b16 %v1625
        %v1698 = vunpack.c.h.b16 %v1625
        %v1699 = vunpack.c.l.b16 %v1626
        %v1700 = vunpack.c.h.b16 %v1626
        %v1701 = vunpack.c.l.b16 %v1627
        %v1702 = vunpack.c.h.b16 %v1627
        %v1703 = vunpack.c.l.b16 %v1628
        %v1704 = vunpack.c.h.b16 %v1628
        %v1705 = vunpack.c.l.b16 %v1629
        %v1706 = vunpack.c.h.b16 %v1629
        %v1707 = vunpack.c.l.b16 %v1630
        %v1708 = vunpack.c.h.b16 %v1630
        %v1709 = vunpack.c.l.b16 %v1631
        %v1710 = vunpack.c.h.b16 %v1631
        %v1711 = vunpack.c.l.b16 %v1632
        %v1712 = vunpack.c.h.b16 %v1632
        %v1713 = vunpack.c.l.b16 %v1633
        %v1714 = vunpack.c.h.b16 %v1633
        %v1715 = vunpack.c.l.b16 %v1634
        %v1716 = vunpack.c.h.b16 %v1634
        %v1717 = vunpack.c.l.b16 %v1635
        %v1718 = vunpack.c.h.b16 %v1635
        %v1719 = vunpack.c.l.b16 %v1636
        %v1720 = vunpack.c.h.b16 %v1636
        %v1721 = vunpack.c.l.b16 %v1637
        %v1722 = vunpack.c.h.b16 %v1637
        %v1723 = vunpack.c.l.b16 %v1638
        %v1724 = vunpack.c.h.b16 %v1638
        %v1725 = vunpack.c.l.b16 %v1639
        %v1726 = vunpack.c.h.b16 %v1639
        %v1727 = vunpack.c.l.b16 %v1640
        %v1728 = vunpack.c.h.b16 %v1640
        %v1729 = vunpack.c.l.b16 %v1641
        %v1730 = vunpack.c.h.b16 %v1641
        %v1731 = vunpack.c.l.b16 %v1642
        %v1732 = vunpack.c.h.b16 %v1642
        %v1733 = vunpack.c.l.b16 %v1643
        %v1734 = vunpack.c.h.b16 %v1643
        %v1735 = vunpack.c.l.b16 %v1644
        %v1736 = vunpack.c.h.b16 %v1644
        %v1737 = vunpack.c.l.b16 %v1645
        %v1738 = vunpack.c.h.b16 %v1645
        %v1739 = vunpack.c.l.b16 %v1646
        %v1740 = vunpack.c.h.b16 %v1646
        %v1741 = vunpack.c.l.b16 %v1647
        %v1742 = vunpack.c.h.b16 %v1647
        %v1743 = vunpack.c.l.b16 %v1648
        %v1744 = vunpack.c.h.b16 %v1648
        %v1745 = vunpack.c.l.b16 %v1649
        %v1746 = vunpack.c.h.b16 %v1649
        %v1747 = vpack.c.b16 %v1687, %v1683
        %v1748 = vpack.c.b16 %v1688, %v1684
        %v1749 = vpack.c.b16 %v1689, %v1685
        %v1750 = vpack.c.b16 %v1690, %v1686
        %v1751 = vpack.c.b16 %v1695, %v1691
        %v1752 = vpack.c.b16 %v1696, %v1692
        %v1753 = vpack.c.b16 %v1697, %v1693
        %v1754 = vpack.c.b16 %v1698, %v1694
        %v1755 = vpack.c.b16 %v1703, %v1699
        %v1756 = vpack.c.b16 %v1704, %v1700
        %v1757 = vpack.c.b16 %v1705, %v1701
        %v1758 = vpack.c.b16 %v1706, %v1702
        %v1759 = vpack.c.b16 %v1711, %v1707
        %v1760 = vpack.c.b16 %v1712, %v1708
        %v1761 = vpack.c.b16 %v1713, %v1709
        %v1762 = vpack.c.b16 %v1714, %v1710
        %v1763 = vpack.c.b16 %v1719, %v1715
        %v1764 = vpack.c.b16 %v1720, %v1716
        %v1765 = vpack.c.b16 %v1721, %v1717
        %v1766 = vpack.c.b16 %v1722, %v1718
        %v1767 = vpack.c.b16 %v1727, %v1723
        %v1768 = vpack.c.b16 %v1728, %v1724
        %v1769 = vpack.c.b16 %v1729, %v1725
        %v1770 = vpack.c.b16 %v1730, %v1726
        %v1771 = vpack.c.b16 %v1735, %v1731
        %v1772 = vpack.c.b16 %v1736, %v1732
        %v1773 = vpack.c.b16 %v1737, %v1733
        %v1774 = vpack.c.b16 %v1738, %v1734
        %v1775 = vpack.c.b16 %v1743, %v1739
        %v1776 = vpack.c.b16 %v1744, %v1740
        %v1777 = vpack.c.b16 %v1745, %v1741
        %v1778 = vpack.c.b16 %v1746, %v1742
        %1811 = vmatprep.subr.bf16.mxu0 %v1748
        %1812 = vmatpush1.bf16.msra.mxu0 %v1747
        %1813 = vmatprep.subr.bf16.mxu0 %v1752
        %1814 = vmatpush1.bf16.msra.mxu0 %v1751
        %1815 = vmatprep.subr.bf16.mxu0 %v1756
        %1816 = vmatpush1.bf16.msra.mxu0 %v1755
        %1817 = vmatprep.subr.bf16.mxu0 %v1760
        %1818 = vmatpush1.bf16.msra.mxu0 %v1759
        %1819 = vmatprep.subr.bf16.mxu0 %v1764
        %1820 = vmatpush1.bf16.msra.mxu0 %v1763
        %1821 = vmatprep.subr.bf16.mxu0 %v1768
        %1822 = vmatpush1.bf16.msra.mxu0 %v1767
        %1823 = vmatprep.subr.bf16.mxu0 %v1772
        %1824 = vmatpush1.bf16.msra.mxu0 %v1771
        %1825 = vmatprep.subr.bf16.mxu0 %v1776
        %1826 = vmatpush1.bf16.msra.mxu0 %v1775
        %1827 = vmatprep.subr.bf16.mxu0 0
        %1828 = vmatpush1.bf16.msra.mxu0 0
        %1829 = vmatprep.subr.bf16.mxu0 0
        %1830 = vmatpush1.bf16.msra.mxu0 0
        %1831 = vmatprep.subr.bf16.mxu0 0
        %1832 = vmatpush1.bf16.msra.mxu0 0
        %1833 = vmatprep.subr.bf16.mxu0 0
        %1834 = vmatpush1.bf16.msra.mxu0 0
        %1835 = vmatprep.subr.bf16.mxu0 0
        %1836 = vmatpush1.bf16.msra.mxu0 0
        %1837 = vmatprep.subr.bf16.mxu0 0
        %1838 = vmatpush1.bf16.msra.mxu0 0
        %1839 = vmatprep.subr.bf16.mxu0 0
        %1840 = vmatpush1.bf16.msra.mxu0 0
        %1841 = vmatprep.subr.bf16.mxu0 0
        %1842 = vmatpush1.bf16.msra.mxu0 0
        %1843 = vmatprep.mubr.bf16.mxu0 0
        %1844 = vmatmul.mubr.bf16.gmra.mrb[0].mxu0 %v1650
        %v1845 = vpop.f32.mrb[0].mxu0
        %v1846 = vadd.f32 0.0, %v1845
        %v1847 = vpop.f32.mrb[0].mxu0
        %v1848 = vadd.f32 0.0, %v1847
        %v1849 = vpop.f32.mrb[0].mxu0
        %v1850 = vpop.f32.mrb[0].mxu0
        %1851 = vdwg.mxu0
        %1852 = vmatprep.subr.bf16.mxu0 %v1750
        %1853 = vmatpush1.bf16.msra.mxu0 %v1749
        %1854 = vmatprep.subr.bf16.mxu0 %v1754
        %1855 = vmatpush1.bf16.msra.mxu0 %v1753
        %1856 = vmatprep.subr.bf16.mxu0 %v1758
        %1857 = vmatpush1.bf16.msra.mxu0 %v1757
        %1858 = vmatprep.subr.bf16.mxu0 %v1762
        %1859 = vmatpush1.bf16.msra.mxu0 %v1761
        %1860 = vmatprep.subr.bf16.mxu0 %v1766
        %1861 = vmatpush1.bf16.msra.mxu0 %v1765
        %1862 = vmatprep.subr.bf16.mxu0 %v1770
        %1863 = vmatpush1.bf16.msra.mxu0 %v1769
        %1864 = vmatprep.subr.bf16.mxu0 %v1774
        %1865 = vmatpush1.bf16.msra.mxu0 %v1773
        %1866 = vmatprep.subr.bf16.mxu0 %v1778
        %1867 = vmatpush1.bf16.msra.mxu0 %v1777
        %1868 = vmatprep.subr.bf16.mxu0 0
        %1869 = vmatpush1.bf16.msra.mxu0 0
        %1870 = vmatprep.subr.bf16.mxu0 0
        %1871 = vmatpush1.bf16.msra.mxu0 0
        %1872 = vmatprep.subr.bf16.mxu0 0
        %1873 = vmatpush1.bf16.msra.mxu0 0
        %1874 = vmatprep.subr.bf16.mxu0 0
        %1875 = vmatpush1.bf16.msra.mxu0 0
        %1876 = vmatprep.subr.bf16.mxu0 0
        %1877 = vmatpush1.bf16.msra.mxu0 0
        %1878 = vmatprep.subr.bf16.mxu0 0
        %1879 = vmatpush1.bf16.msra.mxu0 0
        %1880 = vmatprep.subr.bf16.mxu0 0
        %1881 = vmatpush1.bf16.msra.mxu0 0
        %1882 = vmatprep.subr.bf16.mxu0 0
        %1883 = vmatpush1.bf16.msra.mxu0 0
        %1884 = vmatprep.mubr.bf16.mxu0 0
        %1885 = vmatmul.mubr.bf16.gmra.mrb[0].mxu0 %v1650
        %v1886 = vpop.f32.mrb[0].mxu0
        %v1887 = vadd.f32 0.0, %v1886
        %v1888 = vpop.f32.mrb[0].mxu0
        %v1889 = vadd.f32 0.0, %v1888
        %v1890 = vpop.f32.mrb[0].mxu0
        %v1891 = vpop.f32.mrb[0].mxu0
        %1892 = vdwg.mxu0
        %v1893 = vld [vmem:[%s5] sm:$0xf]
        %s1894 = scalar_lea.vmem %s5, 4
        %v1895 = vld [vmem:[%s1894] sm:$0xf]
        %vm1896 = vcmask 64512
        %v1898 = vsel %vm1896, %v1895, 0
        %1900 = vmatprep.subr.mxu0 0.0
        %1901 = vmatpush1.msra.mxu0 %v1848
        %1902 = vmatprep.subr.mxu0 0.0
        %1903 = vmatpush1.msra.mxu0 0.0
        %1904 = vmatprep.subr.mxu0 0.0
        %1905 = vmatpush1.msra.mxu0 0.0
        %1906 = vmatprep.subr.mxu0 0.0
        %1907 = vmatpush1.msra.mxu0 0.0
        %1908 = vmatprep.subr.mxu0 0.0
        %1909 = vmatpush1.msra.mxu0 0.0
        %1910 = vmatprep.subr.mxu0 0.0
        %1911 = vmatpush1.msra.mxu0 0.0
        %1912 = vmatprep.subr.mxu0 0.0
        %1913 = vmatpush1.msra.mxu0 0.0
        %1914 = vmatprep.subr.mxu0 0.0
        %1915 = vmatpush1.msra.mxu0 0.0
        %1916 = vmatprep.subr.mxu0 0.0
        %1917 = vmatpush1.msra.mxu0 0.0
        %1918 = vmatprep.subr.mxu0 0.0
        %1919 = vmatpush1.msra.mxu0 0.0
        %1920 = vmatprep.subr.mxu0 0.0
        %1921 = vmatpush1.msra.mxu0 0.0
        %1922 = vmatprep.subr.mxu0 0.0
        %1923 = vmatpush1.msra.mxu0 0.0
        %1924 = vmatprep.subr.mxu0 0.0
        %1925 = vmatpush1.msra.mxu0 0.0
        %1926 = vmatprep.subr.mxu0 0.0
        %1927 = vmatpush1.msra.mxu0 0.0
        %1928 = vmatprep.subr.mxu0 0.0
        %1929 = vmatpush1.msra.mxu0 0.0
        %1930 = vmatprep.subr.mxu0 0.0
        %1931 = vmatpush1.msra.mxu0 0.0
        %1932 = vmatprep.subr.mxu0 0.0
        %1933 = vmatpush1.msra.mxu0 0.0
        %1934 = vmatprep.subr.mxu0 0.0
        %1935 = vmatpush1.msra.mxu0 0.0
        %1936 = vmatprep.subr.mxu0 0.0
        %1937 = vmatpush1.msra.mxu0 0.0
        %1938 = vmatprep.subr.mxu0 0.0
        %1939 = vmatpush1.msra.mxu0 0.0
        %1940 = vmatprep.subr.mxu0 0.0
        %1941 = vmatpush1.msra.mxu0 0.0
        %1942 = vmatprep.subr.mxu0 0.0
        %1943 = vmatpush1.msra.mxu0 0.0
        %1944 = vmatprep.subr.mxu0 0.0
        %1945 = vmatpush1.msra.mxu0 0.0
        %1946 = vmatprep.subr.mxu0 0.0
        %1947 = vmatpush1.msra.mxu0 0.0
        %1948 = vmatprep.subr.mxu0 0.0
        %1949 = vmatpush1.msra.mxu0 0.0
        %1950 = vmatprep.subr.mxu0 0.0
        %1951 = vmatpush1.msra.mxu0 0.0
        %1952 = vmatprep.subr.mxu0 0.0
        %1953 = vmatpush1.msra.mxu0 0.0
        %1954 = vmatprep.subr.mxu0 0.0
        %1955 = vmatpush1.msra.mxu0 0.0
        %1956 = vmatprep.subr.mxu0 0.0
        %1957 = vmatpush1.msra.mxu0 0.0
        %1958 = vmatprep.subr.mxu0 0.0
        %1959 = vmatpush1.msra.mxu0 0.0
        %1960 = vmatprep.subr.mxu0 0.0
        %1961 = vmatpush1.msra.mxu0 0.0
        %1962 = vmatprep.subr.mxu0 0.0
        %1963 = vmatpush1.msra.mxu0 0.0
        %1964 = vmatprep.mubr.f32.mxu0 0.0
        %1965 = vmatmul.mubr.f32.gmra.mrb[0].mxu0 %v1898
        %v1966 = vpop.f32.mrb[0].mxu0
        %v1967 = vadd.f32 0.0, %v1966
        %v1968 = vpop.f32.mrb[0].mxu0
        %1969 = vdwg.mxu0
        %v1971 = vsel %vm1896, %v1893, 0
        %1973 = vmatprep.subr.mxu0 0.0
        %1974 = vmatpush1.msra.mxu0 %v1846
        %1975 = vmatprep.subr.mxu0 0.0
        %1976 = vmatpush1.msra.mxu0 0.0
        %1977 = vmatprep.subr.mxu0 0.0
        %1978 = vmatpush1.msra.mxu0 0.0
        %1979 = vmatprep.subr.mxu0 0.0
        %1980 = vmatpush1.msra.mxu0 0.0
        %1981 = vmatprep.subr.mxu0 0.0
        %1982 = vmatpush1.msra.mxu0 0.0
        %1983 = vmatprep.subr.mxu0 0.0
        %1984 = vmatpush1.msra.mxu0 0.0
        %1985 = vmatprep.subr.mxu0 0.0
        %1986 = vmatpush1.msra.mxu0 0.0
        %1987 = vmatprep.subr.mxu0 0.0
        %1988 = vmatpush1.msra.mxu0 0.0
        %1989 = vmatprep.subr.mxu0 0.0
        %1990 = vmatpush1.msra.mxu0 0.0
        %1991 = vmatprep.subr.mxu0 0.0
        %1992 = vmatpush1.msra.mxu0 0.0
        %1993 = vmatprep.subr.mxu0 0.0
        %1994 = vmatpush1.msra.mxu0 0.0
        %1995 = vmatprep.subr.mxu0 0.0
        %1996 = vmatpush1.msra.mxu0 0.0
        %1997 = vmatprep.subr.mxu0 0.0
        %1998 = vmatpush1.msra.mxu0 0.0
        %1999 = vmatprep.subr.mxu0 0.0
        %2000 = vmatpush1.msra.mxu0 0.0
        %2001 = vmatprep.subr.mxu0 0.0
        %2002 = vmatpush1.msra.mxu0 0.0
        %2003 = vmatprep.subr.mxu0 0.0
        %2004 = vmatpush1.msra.mxu0 0.0
        %2005 = vmatprep.subr.mxu0 0.0
        %2006 = vmatpush1.msra.mxu0 0.0
        %2007 = vmatprep.subr.mxu0 0.0
        %2008 = vmatpush1.msra.mxu0 0.0
        %2009 = vmatprep.subr.mxu0 0.0
        %2010 = vmatpush1.msra.mxu0 0.0
        %2011 = vmatprep.subr.mxu0 0.0
        %2012 = vmatpush1.msra.mxu0 0.0
        %2013 = vmatprep.subr.mxu0 0.0
        %2014 = vmatpush1.msra.mxu0 0.0
        %2015 = vmatprep.subr.mxu0 0.0
        %2016 = vmatpush1.msra.mxu0 0.0
        %2017 = vmatprep.subr.mxu0 0.0
        %2018 = vmatpush1.msra.mxu0 0.0
        %2019 = vmatprep.subr.mxu0 0.0
        %2020 = vmatpush1.msra.mxu0 0.0
        %2021 = vmatprep.subr.mxu0 0.0
        %2022 = vmatpush1.msra.mxu0 0.0
        %2023 = vmatprep.subr.mxu0 0.0
        %2024 = vmatpush1.msra.mxu0 0.0
        %2025 = vmatprep.subr.mxu0 0.0
        %2026 = vmatpush1.msra.mxu0 0.0
        %2027 = vmatprep.subr.mxu0 0.0
        %2028 = vmatpush1.msra.mxu0 0.0
        %2029 = vmatprep.subr.mxu0 0.0
        %2030 = vmatpush1.msra.mxu0 0.0
        %2031 = vmatprep.subr.mxu0 0.0
        %2032 = vmatpush1.msra.mxu0 0.0
        %2033 = vmatprep.subr.mxu0 0.0
        %2034 = vmatpush1.msra.mxu0 0.0
        %2035 = vmatprep.subr.mxu0 0.0
        %2036 = vmatpush1.msra.mxu0 0.0
        %2037 = vmatprep.mubr.f32.mxu0 0.0
        %2038 = vmatmul.mubr.f32.gmra.mrb[0].mxu0 %v1971
        %v2039 = vpop.f32.mrb[0].mxu0
        %v2040 = vadd.f32 %v1967, %v2039
        %v2041 = vpop.f32.mrb[0].mxu0
        %2042 = vdwg.mxu0
        %s2043 = scalar_lea.vmem %s5, 8
        %v2044 = vld [vmem:[%s2043] sm:$0xf]
        %v2046 = vsel %vm1896, %v2044, 0
        %2048 = vmatprep.subr.mxu0 0.0
        %2049 = vmatpush1.msra.mxu0 %v1887
        %2050 = vmatprep.subr.mxu0 0.0
        %2051 = vmatpush1.msra.mxu0 0.0
        %2052 = vmatprep.subr.mxu0 0.0
        %2053 = vmatpush1.msra.mxu0 0.0
        %2054 = vmatprep.subr.mxu0 0.0
        %2055 = vmatpush1.msra.mxu0 0.0
        %2056 = vmatprep.subr.mxu0 0.0
        %2057 = vmatpush1.msra.mxu0 0.0
        %2058 = vmatprep.subr.mxu0 0.0
        %2059 = vmatpush1.msra.mxu0 0.0
        %2060 = vmatprep.subr.mxu0 0.0
        %2061 = vmatpush1.msra.mxu0 0.0
        %2062 = vmatprep.subr.mxu0 0.0
        %2063 = vmatpush1.msra.mxu0 0.0
        %2064 = vmatprep.subr.mxu0 0.0
        %2065 = vmatpush1.msra.mxu0 0.0
        %2066 = vmatprep.subr.mxu0 0.0
        %2067 = vmatpush1.msra.mxu0 0.0
        %2068 = vmatprep.subr.mxu0 0.0
        %2069 = vmatpush1.msra.mxu0 0.0
        %2070 = vmatprep.subr.mxu0 0.0
        %2071 = vmatpush1.msra.mxu0 0.0
        %2072 = vmatprep.subr.mxu0 0.0
        %2073 = vmatpush1.msra.mxu0 0.0
        %2074 = vmatprep.subr.mxu0 0.0
        %2075 = vmatpush1.msra.mxu0 0.0
        %2076 = vmatprep.subr.mxu0 0.0
        %2077 = vmatpush1.msra.mxu0 0.0
        %2078 = vmatprep.subr.mxu0 0.0
        %2079 = vmatpush1.msra.mxu0 0.0
        %2080 = vmatprep.subr.mxu0 0.0
        %2081 = vmatpush1.msra.mxu0 0.0
        %2082 = vmatprep.subr.mxu0 0.0
        %2083 = vmatpush1.msra.mxu0 0.0
        %2084 = vmatprep.subr.mxu0 0.0
        %2085 = vmatpush1.msra.mxu0 0.0
        %2086 = vmatprep.subr.mxu0 0.0
        %2087 = vmatpush1.msra.mxu0 0.0
        %2088 = vmatprep.subr.mxu0 0.0
        %2089 = vmatpush1.msra.mxu0 0.0
        %2090 = vmatprep.subr.mxu0 0.0
        %2091 = vmatpush1.msra.mxu0 0.0
        %2092 = vmatprep.subr.mxu0 0.0
        %2093 = vmatpush1.msra.mxu0 0.0
        %2094 = vmatprep.subr.mxu0 0.0
        %2095 = vmatpush1.msra.mxu0 0.0
        %2096 = vmatprep.subr.mxu0 0.0
        %2097 = vmatpush1.msra.mxu0 0.0
        %2098 = vmatprep.subr.mxu0 0.0
        %2099 = vmatpush1.msra.mxu0 0.0
        %2100 = vmatprep.subr.mxu0 0.0
        %2101 = vmatpush1.msra.mxu0 0.0
        %2102 = vmatprep.subr.mxu0 0.0
        %2103 = vmatpush1.msra.mxu0 0.0
        %2104 = vmatprep.subr.mxu0 0.0
        %2105 = vmatpush1.msra.mxu0 0.0
        %2106 = vmatprep.subr.mxu0 0.0
        %2107 = vmatpush1.msra.mxu0 0.0
        %2108 = vmatprep.subr.mxu0 0.0
        %2109 = vmatpush1.msra.mxu0 0.0
        %2110 = vmatprep.subr.mxu0 0.0
        %2111 = vmatpush1.msra.mxu0 0.0
        %2112 = vmatprep.mubr.f32.mxu0 0.0
        %2113 = vmatmul.mubr.f32.gmra.mrb[0].mxu0 %v2046
        %v2114 = vpop.f32.mrb[0].mxu0
        %v2115 = vadd.f32 0.0, %v2114
        %v2116 = vpop.f32.mrb[0].mxu0
        %2117 = vdwg.mxu0
        %v2118 = vadd.f32 %v2040, %v2115
        %s2119 = scalar_lea.vmem %s5, 12
        %v2120 = vld [vmem:[%s2119] sm:$0xf]
        %v2122 = vsel %vm1896, %v2120, 0
        %2124 = vmatprep.subr.mxu0 0.0
        %2125 = vmatpush1.msra.mxu0 %v1889
        %2126 = vmatprep.subr.mxu0 0.0
        %2127 = vmatpush1.msra.mxu0 0.0
        %2128 = vmatprep.subr.mxu0 0.0
        %2129 = vmatpush1.msra.mxu0 0.0
        %2130 = vmatprep.subr.mxu0 0.0
        %2131 = vmatpush1.msra.mxu0 0.0
        %2132 = vmatprep.subr.mxu0 0.0
        %2133 = vmatpush1.msra.mxu0 0.0
        %2134 = vmatprep.subr.mxu0 0.0
        %2135 = vmatpush1.msra.mxu0 0.0
        %2136 = vmatprep.subr.mxu0 0.0
        %2137 = vmatpush1.msra.mxu0 0.0
        %2138 = vmatprep.subr.mxu0 0.0
        %2139 = vmatpush1.msra.mxu0 0.0
        %2140 = vmatprep.subr.mxu0 0.0
        %2141 = vmatpush1.msra.mxu0 0.0
        %2142 = vmatprep.subr.mxu0 0.0
        %2143 = vmatpush1.msra.mxu0 0.0
        %2144 = vmatprep.subr.mxu0 0.0
        %2145 = vmatpush1.msra.mxu0 0.0
        %2146 = vmatprep.subr.mxu0 0.0
        %2147 = vmatpush1.msra.mxu0 0.0
        %2148 = vmatprep.subr.mxu0 0.0
        %2149 = vmatpush1.msra.mxu0 0.0
        %2150 = vmatprep.subr.mxu0 0.0
        %2151 = vmatpush1.msra.mxu0 0.0
        %2152 = vmatprep.subr.mxu0 0.0
        %2153 = vmatpush1.msra.mxu0 0.0
        %2154 = vmatprep.subr.mxu0 0.0
        %2155 = vmatpush1.msra.mxu0 0.0
        %2156 = vmatprep.subr.mxu0 0.0
        %2157 = vmatpush1.msra.mxu0 0.0
        %2158 = vmatprep.subr.mxu0 0.0
        %2159 = vmatpush1.msra.mxu0 0.0
        %2160 = vmatprep.subr.mxu0 0.0
        %2161 = vmatpush1.msra.mxu0 0.0
        %2162 = vmatprep.subr.mxu0 0.0
        %2163 = vmatpush1.msra.mxu0 0.0
        %2164 = vmatprep.subr.mxu0 0.0
        %2165 = vmatpush1.msra.mxu0 0.0
        %2166 = vmatprep.subr.mxu0 0.0
        %2167 = vmatpush1.msra.mxu0 0.0
        %2168 = vmatprep.subr.mxu0 0.0
        %2169 = vmatpush1.msra.mxu0 0.0
        %2170 = vmatprep.subr.mxu0 0.0
        %2171 = vmatpush1.msra.mxu0 0.0
        %2172 = vmatprep.subr.mxu0 0.0
        %2173 = vmatpush1.msra.mxu0 0.0
        %2174 = vmatprep.subr.mxu0 0.0
        %2175 = vmatpush1.msra.mxu0 0.0
        %2176 = vmatprep.subr.mxu0 0.0
        %2177 = vmatpush1.msra.mxu0 0.0
        %2178 = vmatprep.subr.mxu0 0.0
        %2179 = vmatpush1.msra.mxu0 0.0
        %2180 = vmatprep.subr.mxu0 0.0
        %2181 = vmatpush1.msra.mxu0 0.0
        %2182 = vmatprep.subr.mxu0 0.0
        %2183 = vmatpush1.msra.mxu0 0.0
        %2184 = vmatprep.subr.mxu0 0.0
        %2185 = vmatpush1.msra.mxu0 0.0
        %2186 = vmatprep.subr.mxu0 0.0
        %2187 = vmatpush1.msra.mxu0 0.0
        %2188 = vmatprep.mubr.f32.mxu0 0.0
        %2189 = vmatmul.mubr.f32.gmra.mrb[0].mxu0 %v2122
        %v2190 = vpop.f32.mrb[0].mxu0
        %v2191 = vadd.f32 0.0, %v2190
        %v2192 = vpop.f32.mrb[0].mxu0
        %2193 = vdwg.mxu0
        %v2194 = vadd.f32 %v2118, %v2191
        %v2195 = vld [vmem:[#allocation7 + $0x2] sm:$0x1]
        %v2196 = vlaneseq
        %v2197 = vshrl.u32 %v2196, 7
        %v2198 = vsub.s32 0, %v2197
        %v2199 = vrot.slane %v2195, %v2198
        %v2200 = vadd.f32 %v2194, %v2199
        %vm2201 = vcmp.ge.f32.partialorder %v2200, 0.0
        %v2202 = vmul.f32 %v2200, 0.01
        %v2203 = vsel %vm2201, %v2200, %v2202
        %v2204 = vld [vmem:[#allocation5 + $0x30] sm:$0xff]
        %v2205 = vld [vmem:[#allocation5 + $0x38] sm:$0xf]
        %v2206 = vld [vmem:[#allocation5 + $0x6c] sm:$0xff]
        %v2207 = vld [vmem:[#allocation5 + $0x74] sm:$0xf]
        %v2208 = vld [vmem:[#allocation5 + $0xa8] sm:$0xff]
        %v2209 = vld [vmem:[#allocation5 + $0xb0] sm:$0xf]
        %v2210 = vld [vmem:[#allocation5 + $0xe4] sm:$0xff]
        %v2211 = vld [vmem:[#allocation5 + $0xec] sm:$0xf]
        %v2212 = vld [vmem:[#allocation5 + $0x120] sm:$0xff]
        %v2213 = vld [vmem:[#allocation5 + $0x128] sm:$0xf]
        %v2214 = vld [vmem:[#allocation5 + $0x15c] sm:$0xff]
        %v2215 = vld [vmem:[#allocation5 + $0x164] sm:$0xf]
        %v2216 = vld [vmem:[#allocation5 + $0x198] sm:$0xff]
        %v2217 = vld [vmem:[#allocation5 + $0x1a0] sm:$0xf]
        %v2218 = vld [vmem:[#allocation5 + $0x1d4] sm:$0xff]
        %v2219 = vld [vmem:[#allocation5 + $0x1dc] sm:$0xf]
        %v2220 = vld [vmem:[#allocation5 + $0x210] sm:$0xff]
        %v2221 = vld [vmem:[#allocation5 + $0x218] sm:$0xf]
        %v2222 = vld [vmem:[#allocation5 + $0x24c] sm:$0xff]
        %v2223 = vld [vmem:[#allocation5 + $0x254] sm:$0xf]
        %v2224 = vld [vmem:[#allocation5 + $0x288] sm:$0xff]
        %v2225 = vld [vmem:[#allocation5 + $0x290] sm:$0xf]
        %v2226 = vld [vmem:[#allocation5 + $0x2c4] sm:$0xff]
        %v2227 = vld [vmem:[#allocation5 + $0x2cc] sm:$0xf]
        %v2228 = vld [vmem:[#allocation5 + $0x300] sm:$0xff]
        %v2229 = vld [vmem:[#allocation5 + $0x308] sm:$0xf]
        %v2230 = vld [vmem:[#allocation5 + $0x33c] sm:$0xff]
        %v2231 = vld [vmem:[#allocation5 + $0x344] sm:$0xf]
        %v2232 = vld [vmem:[#allocation5 + $0x378] sm:$0xff]
        %v2233 = vld [vmem:[#allocation5 + $0x380] sm:$0xf]
        %v2234 = vld [vmem:[#allocation5 + $0x3b4] sm:$0xff]
        %v2235 = vld [vmem:[#allocation5 + $0x3bc] sm:$0xf]
        %v2236 = vpack.c.bf16 %v2203, %v2203
        %v2269 = vunpack.c.l.b16 %v2204
        %v2270 = vunpack.c.h.b16 %v2204
        %v2271 = vunpack.c.l.b16 %v2205
        %v2272 = vunpack.c.l.b16 %v2206
        %v2273 = vunpack.c.h.b16 %v2206
        %v2274 = vunpack.c.l.b16 %v2207
        %v2275 = vunpack.c.l.b16 %v2208
        %v2276 = vunpack.c.h.b16 %v2208
        %v2277 = vunpack.c.l.b16 %v2209
        %v2278 = vunpack.c.l.b16 %v2210
        %v2279 = vunpack.c.h.b16 %v2210
        %v2280 = vunpack.c.l.b16 %v2211
        %v2281 = vunpack.c.l.b16 %v2212
        %v2282 = vunpack.c.h.b16 %v2212
        %v2283 = vunpack.c.l.b16 %v2213
        %v2284 = vunpack.c.l.b16 %v2214
        %v2285 = vunpack.c.h.b16 %v2214
        %v2286 = vunpack.c.l.b16 %v2215
        %v2287 = vunpack.c.l.b16 %v2216
        %v2288 = vunpack.c.h.b16 %v2216
        %v2289 = vunpack.c.l.b16 %v2217
        %v2290 = vunpack.c.l.b16 %v2218
        %v2291 = vunpack.c.h.b16 %v2218
        %v2292 = vunpack.c.l.b16 %v2219
        %v2293 = vunpack.c.l.b16 %v2220
        %v2294 = vunpack.c.h.b16 %v2220
        %v2295 = vunpack.c.l.b16 %v2221
        %v2296 = vunpack.c.l.b16 %v2222
        %v2297 = vunpack.c.h.b16 %v2222
        %v2298 = vunpack.c.l.b16 %v2223
        %v2299 = vunpack.c.l.b16 %v2224
        %v2300 = vunpack.c.h.b16 %v2224
        %v2301 = vunpack.c.l.b16 %v2225
        %v2302 = vunpack.c.l.b16 %v2226
        %v2303 = vunpack.c.h.b16 %v2226
        %v2304 = vunpack.c.l.b16 %v2227
        %v2305 = vunpack.c.l.b16 %v2228
        %v2306 = vunpack.c.h.b16 %v2228
        %v2307 = vunpack.c.l.b16 %v2229
        %v2308 = vunpack.c.l.b16 %v2230
        %v2309 = vunpack.c.h.b16 %v2230
        %v2310 = vunpack.c.l.b16 %v2231
        %v2311 = vunpack.c.l.b16 %v2232
        %v2312 = vunpack.c.h.b16 %v2232
        %v2313 = vunpack.c.l.b16 %v2233
        %v2314 = vunpack.c.l.b16 %v2234
        %v2315 = vunpack.c.h.b16 %v2234
        %v2316 = vunpack.c.l.b16 %v2235
        %v2317 = vpack.c.b16 %v2272, %v2269
        %v2318 = vpack.c.b16 %v2273, %v2270
        %v2319 = vpack.c.b16 %v2274, %v2271
        %v2320 = vpack.c.b16 %v2278, %v2275
        %v2321 = vpack.c.b16 %v2279, %v2276
        %v2322 = vpack.c.b16 %v2280, %v2277
        %v2323 = vpack.c.b16 %v2284, %v2281
        %v2324 = vpack.c.b16 %v2285, %v2282
        %v2325 = vpack.c.b16 %v2286, %v2283
        %v2326 = vpack.c.b16 %v2290, %v2287
        %v2327 = vpack.c.b16 %v2291, %v2288
        %v2328 = vpack.c.b16 %v2292, %v2289
        %v2329 = vpack.c.b16 %v2296, %v2293
        %v2330 = vpack.c.b16 %v2297, %v2294
        %v2331 = vpack.c.b16 %v2298, %v2295
        %v2332 = vpack.c.b16 %v2302, %v2299
        %v2333 = vpack.c.b16 %v2303, %v2300
        %v2334 = vpack.c.b16 %v2304, %v2301
        %v2335 = vpack.c.b16 %v2308, %v2305
        %v2336 = vpack.c.b16 %v2309, %v2306
        %v2337 = vpack.c.b16 %v2310, %v2307
        %v2338 = vpack.c.b16 %v2314, %v2311
        %v2339 = vpack.c.b16 %v2315, %v2312
        %v2340 = vpack.c.b16 %v2316, %v2313
        %2365 = vmatprep.subr.bf16.mxu0 %v2318
        %2366 = vmatpush1.bf16.msra.mxu0 %v2317
        %2367 = vmatprep.subr.bf16.mxu0 %v2321
        %2368 = vmatpush1.bf16.msra.mxu0 %v2320
        %2369 = vmatprep.subr.bf16.mxu0 %v2324
        %2370 = vmatpush1.bf16.msra.mxu0 %v2323
        %2371 = vmatprep.subr.bf16.mxu0 %v2327
        %2372 = vmatpush1.bf16.msra.mxu0 %v2326
        %2373 = vmatprep.subr.bf16.mxu0 %v2330
        %2374 = vmatpush1.bf16.msra.mxu0 %v2329
        %2375 = vmatprep.subr.bf16.mxu0 %v2333
        %2376 = vmatpush1.bf16.msra.mxu0 %v2332
        %2377 = vmatprep.subr.bf16.mxu0 %v2336
        %2378 = vmatpush1.bf16.msra.mxu0 %v2335
        %2379 = vmatprep.subr.bf16.mxu0 %v2339
        %2380 = vmatpush1.bf16.msra.mxu0 %v2338
        %2381 = vmatprep.subr.bf16.mxu0 0
        %2382 = vmatpush1.bf16.msra.mxu0 0
        %2383 = vmatprep.subr.bf16.mxu0 0
        %2384 = vmatpush1.bf16.msra.mxu0 0
        %2385 = vmatprep.subr.bf16.mxu0 0
        %2386 = vmatpush1.bf16.msra.mxu0 0
        %2387 = vmatprep.subr.bf16.mxu0 0
        %2388 = vmatpush1.bf16.msra.mxu0 0
        %2389 = vmatprep.subr.bf16.mxu0 0
        %2390 = vmatpush1.bf16.msra.mxu0 0
        %2391 = vmatprep.subr.bf16.mxu0 0
        %2392 = vmatpush1.bf16.msra.mxu0 0
        %2393 = vmatprep.subr.bf16.mxu0 0
        %2394 = vmatpush1.bf16.msra.mxu0 0
        %2395 = vmatprep.subr.bf16.mxu0 0
        %2396 = vmatpush1.bf16.msra.mxu0 0
        %2397 = vmatprep.mubr.bf16.mxu0 0
        %2398 = vmatmul.mubr.bf16.gmra.mrb[0].mxu0 %v2236
        %v2399 = vpop.f32.mrb[0].mxu0
        %v2400 = vadd.f32 0.0, %v2399
        %v2401 = vpop.f32.mrb[0].mxu0
        %v2402 = vadd.f32 0.0, %v2401
        %v2403 = vpop.f32.mrb[0].mxu0
        %v2404 = vpop.f32.mrb[0].mxu0
        %2405 = vdwg.mxu0
        %2406 = vmatprep.subr.bf16.mxu0 0
        %2407 = vmatpush1.bf16.msra.mxu0 %v2319
        %2408 = vmatprep.subr.bf16.mxu0 0
        %2409 = vmatpush1.bf16.msra.mxu0 %v2322
        %2410 = vmatprep.subr.bf16.mxu0 0
        %2411 = vmatpush1.bf16.msra.mxu0 %v2325
        %2412 = vmatprep.subr.bf16.mxu0 0
        %2413 = vmatpush1.bf16.msra.mxu0 %v2328
        %2414 = vmatprep.subr.bf16.mxu0 0
        %2415 = vmatpush1.bf16.msra.mxu0 %v2331
        %2416 = vmatprep.subr.bf16.mxu0 0
        %2417 = vmatpush1.bf16.msra.mxu0 %v2334
        %2418 = vmatprep.subr.bf16.mxu0 0
        %2419 = vmatpush1.bf16.msra.mxu0 %v2337
        %2420 = vmatprep.subr.bf16.mxu0 0
        %2421 = vmatpush1.bf16.msra.mxu0 %v2340
        %2422 = vmatprep.subr.bf16.mxu0 0
        %2423 = vmatpush1.bf16.msra.mxu0 0
        %2424 = vmatprep.subr.bf16.mxu0 0
        %2425 = vmatpush1.bf16.msra.mxu0 0
        %2426 = vmatprep.subr.bf16.mxu0 0
        %2427 = vmatpush1.bf16.msra.mxu0 0
        %2428 = vmatprep.subr.bf16.mxu0 0
        %2429 = vmatpush1.bf16.msra.mxu0 0
        %2430 = vmatprep.subr.bf16.mxu0 0
        %2431 = vmatpush1.bf16.msra.mxu0 0
        %2432 = vmatprep.subr.bf16.mxu0 0
        %2433 = vmatpush1.bf16.msra.mxu0 0
        %2434 = vmatprep.subr.bf16.mxu0 0
        %2435 = vmatpush1.bf16.msra.mxu0 0
        %2436 = vmatprep.subr.bf16.mxu0 0
        %2437 = vmatpush1.bf16.msra.mxu0 0
        %2438 = vmatprep.mubr.bf16.mxu0 0
        %2439 = vmatmul.mubr.bf16.gmra.mrb[0].mxu0 %v2236
        %v2440 = vpop.f32.mrb[0].mxu0
        %v2441 = vadd.f32 0.0, %v2440
        %v2442 = vpop.f32.mrb[0].mxu0
        %v2443 = vpop.f32.mrb[0].mxu0
        %v2444 = vpop.f32.mrb[0].mxu0
        %2445 = vdwg.mxu0
        %v2446 = vld [vmem:[#allocation11] sm:$0xf]
        %s2447 = scalar_lea.vmem [#allocation11], 4
        %v2448 = vld [vmem:[%s2447] sm:$0xf]
        %vm2449 = vcmask 31744
        %v2451 = vsel %vm2449, %v2448, 0
        %vm2453 = vcmask 1043456
        %v2455 = vsel %vm2453, %v2402, 0
        %2457 = vmatprep.subr.mxu0 0.0
        %2458 = vmatpush1.msra.mxu0 %v2455
        %2459 = vmatprep.subr.mxu0 0.0
        %2460 = vmatpush1.msra.mxu0 0.0
        %2461 = vmatprep.subr.mxu0 0.0
        %2462 = vmatpush1.msra.mxu0 0.0
        %2463 = vmatprep.subr.mxu0 0.0
        %2464 = vmatpush1.msra.mxu0 0.0
        %2465 = vmatprep.subr.mxu0 0.0
        %2466 = vmatpush1.msra.mxu0 0.0
        %2467 = vmatprep.subr.mxu0 0.0
        %2468 = vmatpush1.msra.mxu0 0.0
        %2469 = vmatprep.subr.mxu0 0.0
        %2470 = vmatpush1.msra.mxu0 0.0
        %2471 = vmatprep.subr.mxu0 0.0
        %2472 = vmatpush1.msra.mxu0 0.0
        %2473 = vmatprep.subr.mxu0 0.0
        %2474 = vmatpush1.msra.mxu0 0.0
        %2475 = vmatprep.subr.mxu0 0.0
        %2476 = vmatpush1.msra.mxu0 0.0
        %2477 = vmatprep.subr.mxu0 0.0
        %2478 = vmatpush1.msra.mxu0 0.0
        %2479 = vmatprep.subr.mxu0 0.0
        %2480 = vmatpush1.msra.mxu0 0.0
        %2481 = vmatprep.subr.mxu0 0.0
        %2482 = vmatpush1.msra.mxu0 0.0
        %2483 = vmatprep.subr.mxu0 0.0
        %2484 = vmatpush1.msra.mxu0 0.0
        %2485 = vmatprep.subr.mxu0 0.0
        %2486 = vmatpush1.msra.mxu0 0.0
        %2487 = vmatprep.subr.mxu0 0.0
        %2488 = vmatpush1.msra.mxu0 0.0
        %2489 = vmatprep.subr.mxu0 0.0
        %2490 = vmatpush1.msra.mxu0 0.0
        %2491 = vmatprep.subr.mxu0 0.0
        %2492 = vmatpush1.msra.mxu0 0.0
        %2493 = vmatprep.subr.mxu0 0.0
        %2494 = vmatpush1.msra.mxu0 0.0
        %2495 = vmatprep.subr.mxu0 0.0
        %2496 = vmatpush1.msra.mxu0 0.0
        %2497 = vmatprep.subr.mxu0 0.0
        %2498 = vmatpush1.msra.mxu0 0.0
        %2499 = vmatprep.subr.mxu0 0.0
        %2500 = vmatpush1.msra.mxu0 0.0
        %2501 = vmatprep.subr.mxu0 0.0
        %2502 = vmatpush1.msra.mxu0 0.0
        %2503 = vmatprep.subr.mxu0 0.0
        %2504 = vmatpush1.msra.mxu0 0.0
        %2505 = vmatprep.subr.mxu0 0.0
        %2506 = vmatpush1.msra.mxu0 0.0
        %2507 = vmatprep.subr.mxu0 0.0
        %2508 = vmatpush1.msra.mxu0 0.0
        %2509 = vmatprep.subr.mxu0 0.0
        %2510 = vmatpush1.msra.mxu0 0.0
        %2511 = vmatprep.subr.mxu0 0.0
        %2512 = vmatpush1.msra.mxu0 0.0
        %2513 = vmatprep.subr.mxu0 0.0
        %2514 = vmatpush1.msra.mxu0 0.0
        %2515 = vmatprep.subr.mxu0 0.0
        %2516 = vmatpush1.msra.mxu0 0.0
        %2517 = vmatprep.subr.mxu0 0.0
        %2518 = vmatpush1.msra.mxu0 0.0
        %2519 = vmatprep.subr.mxu0 0.0
        %2520 = vmatpush1.msra.mxu0 0.0
        %2521 = vmatprep.mubr.f32.mxu0 0.0
        %2522 = vmatmul.mubr.f32.gmra.mrb[0].mxu0 %v2451
        %v2523 = vpop.f32.mrb[0].mxu0
        %v2524 = vadd.f32 0.0, %v2523
        %v2525 = vpop.f32.mrb[0].mxu0
        %2526 = vdwg.mxu0
        %v2528 = vsel %vm2449, %v2446, 0
        %v2531 = vsel %vm2453, %v2400, 0
        %2533 = vmatprep.subr.mxu0 0.0
        %2534 = vmatpush1.msra.mxu0 %v2531
        %2535 = vmatprep.subr.mxu0 0.0
        %2536 = vmatpush1.msra.mxu0 0.0
        %2537 = vmatprep.subr.mxu0 0.0
        %2538 = vmatpush1.msra.mxu0 0.0
        %2539 = vmatprep.subr.mxu0 0.0
        %2540 = vmatpush1.msra.mxu0 0.0
        %2541 = vmatprep.subr.mxu0 0.0
        %2542 = vmatpush1.msra.mxu0 0.0
        %2543 = vmatprep.subr.mxu0 0.0
        %2544 = vmatpush1.msra.mxu0 0.0
        %2545 = vmatprep.subr.mxu0 0.0
        %2546 = vmatpush1.msra.mxu0 0.0
        %2547 = vmatprep.subr.mxu0 0.0
        %2548 = vmatpush1.msra.mxu0 0.0
        %2549 = vmatprep.subr.mxu0 0.0
        %2550 = vmatpush1.msra.mxu0 0.0
        %2551 = vmatprep.subr.mxu0 0.0
        %2552 = vmatpush1.msra.mxu0 0.0
        %2553 = vmatprep.subr.mxu0 0.0
        %2554 = vmatpush1.msra.mxu0 0.0
        %2555 = vmatprep.subr.mxu0 0.0
        %2556 = vmatpush1.msra.mxu0 0.0
        %2557 = vmatprep.subr.mxu0 0.0
        %2558 = vmatpush1.msra.mxu0 0.0
        %2559 = vmatprep.subr.mxu0 0.0
        %2560 = vmatpush1.msra.mxu0 0.0
        %2561 = vmatprep.subr.mxu0 0.0
        %2562 = vmatpush1.msra.mxu0 0.0
        %2563 = vmatprep.subr.mxu0 0.0
        %2564 = vmatpush1.msra.mxu0 0.0
        %2565 = vmatprep.subr.mxu0 0.0
        %2566 = vmatpush1.msra.mxu0 0.0
        %2567 = vmatprep.subr.mxu0 0.0
        %2568 = vmatpush1.msra.mxu0 0.0
        %2569 = vmatprep.subr.mxu0 0.0
        %2570 = vmatpush1.msra.mxu0 0.0
        %2571 = vmatprep.subr.mxu0 0.0
        %2572 = vmatpush1.msra.mxu0 0.0
        %2573 = vmatprep.subr.mxu0 0.0
        %2574 = vmatpush1.msra.mxu0 0.0
        %2575 = vmatprep.subr.mxu0 0.0
        %2576 = vmatpush1.msra.mxu0 0.0
        %2577 = vmatprep.subr.mxu0 0.0
        %2578 = vmatpush1.msra.mxu0 0.0
        %2579 = vmatprep.subr.mxu0 0.0
        %2580 = vmatpush1.msra.mxu0 0.0
        %2581 = vmatprep.subr.mxu0 0.0
        %2582 = vmatpush1.msra.mxu0 0.0
        %2583 = vmatprep.subr.mxu0 0.0
        %2584 = vmatpush1.msra.mxu0 0.0
        %2585 = vmatprep.subr.mxu0 0.0
        %2586 = vmatpush1.msra.mxu0 0.0
        %2587 = vmatprep.subr.mxu0 0.0
        %2588 = vmatpush1.msra.mxu0 0.0
        %2589 = vmatprep.subr.mxu0 0.0
        %2590 = vmatpush1.msra.mxu0 0.0
        %2591 = vmatprep.subr.mxu0 0.0
        %2592 = vmatpush1.msra.mxu0 0.0
        %2593 = vmatprep.subr.mxu0 0.0
        %2594 = vmatpush1.msra.mxu0 0.0
        %2595 = vmatprep.subr.mxu0 0.0
        %2596 = vmatpush1.msra.mxu0 0.0
        %2597 = vmatprep.mubr.f32.mxu0 0.0
        %2598 = vmatmul.mubr.f32.gmra.mrb[0].mxu0 %v2528
        %v2599 = vpop.f32.mrb[0].mxu0
        %v2600 = vadd.f32 %v2524, %v2599
        %v2601 = vpop.f32.mrb[0].mxu0
        %2602 = vdwg.mxu0
        %s2603 = scalar_lea.vmem [#allocation11], 8
        %v2604 = vld [vmem:[%s2603] sm:$0xf]
        %v2606 = vsel %vm2449, %v2604, 0
        %v2609 = vsel %vm2453, %v2441, 0
        %2611 = vmatprep.subr.mxu0 0.0
        %2612 = vmatpush1.msra.mxu0 %v2609
        %2613 = vmatprep.subr.mxu0 0.0
        %2614 = vmatpush1.msra.mxu0 0.0
        %2615 = vmatprep.subr.mxu0 0.0
        %2616 = vmatpush1.msra.mxu0 0.0
        %2617 = vmatprep.subr.mxu0 0.0
        %2618 = vmatpush1.msra.mxu0 0.0
        %2619 = vmatprep.subr.mxu0 0.0
        %2620 = vmatpush1.msra.mxu0 0.0
        %2621 = vmatprep.subr.mxu0 0.0
        %2622 = vmatpush1.msra.mxu0 0.0
        %2623 = vmatprep.subr.mxu0 0.0
        %2624 = vmatpush1.msra.mxu0 0.0
        %2625 = vmatprep.subr.mxu0 0.0
        %2626 = vmatpush1.msra.mxu0 0.0
        %2627 = vmatprep.subr.mxu0 0.0
        %2628 = vmatpush1.msra.mxu0 0.0
        %2629 = vmatprep.subr.mxu0 0.0
        %2630 = vmatpush1.msra.mxu0 0.0
        %2631 = vmatprep.subr.mxu0 0.0
        %2632 = vmatpush1.msra.mxu0 0.0
        %2633 = vmatprep.subr.mxu0 0.0
        %2634 = vmatpush1.msra.mxu0 0.0
        %2635 = vmatprep.subr.mxu0 0.0
        %2636 = vmatpush1.msra.mxu0 0.0
        %2637 = vmatprep.subr.mxu0 0.0
        %2638 = vmatpush1.msra.mxu0 0.0
        %2639 = vmatprep.subr.mxu0 0.0
        %2640 = vmatpush1.msra.mxu0 0.0
        %2641 = vmatprep.subr.mxu0 0.0
        %2642 = vmatpush1.msra.mxu0 0.0
        %2643 = vmatprep.subr.mxu0 0.0
        %2644 = vmatpush1.msra.mxu0 0.0
        %2645 = vmatprep.subr.mxu0 0.0
        %2646 = vmatpush1.msra.mxu0 0.0
        %2647 = vmatprep.subr.mxu0 0.0
        %2648 = vmatpush1.msra.mxu0 0.0
        %2649 = vmatprep.subr.mxu0 0.0
        %2650 = vmatpush1.msra.mxu0 0.0
        %2651 = vmatprep.subr.mxu0 0.0
        %2652 = vmatpush1.msra.mxu0 0.0
        %2653 = vmatprep.subr.mxu0 0.0
        %2654 = vmatpush1.msra.mxu0 0.0
        %2655 = vmatprep.subr.mxu0 0.0
        %2656 = vmatpush1.msra.mxu0 0.0
        %2657 = vmatprep.subr.mxu0 0.0
        %2658 = vmatpush1.msra.mxu0 0.0
        %2659 = vmatprep.subr.mxu0 0.0
        %2660 = vmatpush1.msra.mxu0 0.0
        %2661 = vmatprep.subr.mxu0 0.0
        %2662 = vmatpush1.msra.mxu0 0.0
        %2663 = vmatprep.subr.mxu0 0.0
        %2664 = vmatpush1.msra.mxu0 0.0
        %2665 = vmatprep.subr.mxu0 0.0
        %2666 = vmatpush1.msra.mxu0 0.0
        %2667 = vmatprep.subr.mxu0 0.0
        %2668 = vmatpush1.msra.mxu0 0.0
        %2669 = vmatprep.subr.mxu0 0.0
        %2670 = vmatpush1.msra.mxu0 0.0
        %2671 = vmatprep.subr.mxu0 0.0
        %2672 = vmatpush1.msra.mxu0 0.0
        %2673 = vmatprep.subr.mxu0 0.0
        %2674 = vmatpush1.msra.mxu0 0.0
        %2675 = vmatprep.mubr.f32.mxu0 0.0
        %2676 = vmatmul.mubr.f32.gmra.mrb[0].mxu0 %v2606
        %v2677 = vpop.f32.mrb[0].mxu0
        %v2678 = vadd.f32 0.0, %v2677
        %v2679 = vpop.f32.mrb[0].mxu0
        %2680 = vdwg.mxu0
        %v2681 = vadd.f32 %v2600, %v2678
        %v2682 = vld [vmem:[#allocation7 + $0x3] sm:$0x1]
        %v2683 = vlaneseq
        %v2684 = vshrl.u32 %v2683, 7
        %v2685 = vsub.s32 0, %v2684
        %v2686 = vrot.slane %v2682, %v2685
        %v2687 = vadd.f32 %v2681, %v2686
        %2688 = vst [vmem:[%s367] sm:$0x3] %v2687
        %s2689 = scalar_lea.vmem %s367, 2 [#allocation13]
        %2690 = vst [vmem:[%s2689 - $0x2] sm:$0xc] %v2687
        %s2691 = sand.u32 %s187, 1
        %s2692 = scalar_lea.sflag [#allocation4], %s2691
        %s2693 = sand.u32 %s187, 1
        %s2694 = smul.addr %s2693, 4
        %s2695 = scalar_lea.vmem [#allocation13], %s2694
        // Predicated region
        $region73: #{tpu_custom_call.1} parent=47 // pred_check
          %p2696 = pneg %p197
        $region74: #{tpu_custom_call.1} parent=47 // pred_check_branch
          %2698 = sbr.rel (%p2696) target = $region76
        $region75: #{tpu_custom_call.1} parent=47 // pred_region
          %s2699 = smul.u32 2, %s27
          %s2701 = ssub.s32 64, 64
          %2702 = vsyncadd %s2692, %s2701
          %s2703 = smul.addr %s2699, 32
          %s2704 = scalar_lea.hbm %s7, %s2703
          %s2705 = sshll.u32 %s2695, 4
          %s2706 = int_to_ptr.vmem [resolvable:$true] %s2705
          %2711 = dma.vmem_to_hbm [thread:$0]  %s2706, 64, %s2704, %s2692, 32, 32, 2
        $region76: #{tpu_custom_call.1} parent=47 // pred_fallthru
          _
      $region48: #{tpu_custom_call.1} parent=5 // pred_fallthru
        _
      %p2712 = scmp.le.s32.totalorder 2, %s22
      // Predicated region
      $region77: #{tpu_custom_call.1} parent=5 // pred_check
        %p2713 = pneg %p2712
      $region78: #{tpu_custom_call.1} parent=5 // pred_check_branch
        %2715 = sbr.rel (%p2713) target = $region80
      $region79: #{tpu_custom_call.1} parent=5 // pred_region
        %s2716 = ssub.s32 %s22, 2
        // Predicated region
        $region81: #{tpu_custom_call.1} parent=79 // pred_check
          %p2717 = pneg %p203
        $region82: #{tpu_custom_call.1} parent=79 // pred_check_branch
          %2719 = sbr.rel (%p2717) target = $region84
        $region83: #{tpu_custom_call.1} parent=79 // pred_region
          %s2720 = sand.u32 %s188, 1
          %s2721 = scalar_lea.sflag [#allocation4], %s2720
          %s2722 = sand.u32 %s188, 1
          %s2723 = smul.addr %s2722, 4
          %s2724 = scalar_lea.vmem [#allocation13], %s2723
          %2725 = dma.done %s2721, 64
        $region84: #{tpu_custom_call.1} parent=79 // pred_fallthru
          _
      $region80: #{tpu_custom_call.1} parent=5 // pred_fallthru
        _
    $region6: #{tpu_custom_call.1} parent=1 // loop_footer
      %s26 = sadd.s32 1, %s22
    $region7: #{tpu_custom_call.1} parent=1 // loop_footer_branch
      %21 = sbr.rel target = $region3
    $region8: #{tpu_custom_call.1} parent=1 // loop_exit
      _
    %2726 = vsyncpa [#allocation3], 1
    %s2727 = scalar_lea.sflag [#allocation3], 1
    %2728 = vsyncpa %s2727, 1
    %2729 = vsyncpa [#allocation6], 1
    %2730 = vsyncpa [#allocation9], 1
    %2731 = vsyncpa [#allocation12], 1
    %2732 = vsyncpa [#allocation4], 1
    %s2733 = scalar_lea.sflag [#allocation4], 1
    %2734 = vsyncpa %s2733, 1

</llo_original>
